<compile_context>
chip_gen: v7x
topology: tpu7x:2x2x1
jax: 0.10.0
libtpu: 0.0.40
codegen_flags: <defaults>
</compile_context>

<pallas_src>
import jax
import jax.numpy as jnp
from jax import lax
from jax.experimental import pallas as pl
from jax.experimental.pallas import tpu as pltpu


def _round_up(x, m):
    return (x + m - 1) // m * m


def _sigmoid(x):
    return 1.0 / (1.0 + jnp.exp(-x))


def _lstm_kernel(x_ref, h0_ref, c0_ref, wih_ref, whh_ref, bg_ref,
                 wfc_ref, bfc_ref,
                 out_ref, hn_ref, cn_ref,
                 xw_s, hs_s):
    """Fused single-layer LSTM + output Linear for one batch tile.

    Padded shapes:
      x_ref   (T, TB, In_p)   bf16   time-major input tile
      h0/c0   (TB, Hp)        f32
      wih_ref (In_p, 4*Hp)    bf16   gate blocks [i | f | g | o], pre-transposed
      whh_ref (Hp, 4*Hp)      bf16
      bg_ref  (1, 4*Hp)       f32    b_ih + b_hh fused
      wfc_ref (Hp, Out_p)     bf16
      bfc_ref (1, Out_p)      f32
      out_ref (T, TB, Out_p)  f32
      hn/cn   (TB, Hp)        f32
      xw_s    (T, TB, 4*Hp)   f32 VMEM scratch (x @ W_ih + b, all timesteps)
      hs_s    (T, TB, Hp)     f32 VMEM scratch (h_t for all t, fed to the fc)
    """
    T, TB, In_p = x_ref.shape
    Hp = hn_ref.shape[-1]
    Out_p = out_ref.shape[-1]

    # ---- 1) Input projection for ALL timesteps in one MXU matmul, bias folded
    #         in once (hoisted out of the recurrence).
    x2 = x_ref[...].reshape(T * TB, In_p)
    xw = jnp.dot(x2, wih_ref[...], preferred_element_type=jnp.float32)
    xw = xw + bg_ref[...]
    xw_s[...] = xw.reshape(T, TB, 4 * Hp)

    whh = whh_ref[...]  # resident bf16 (Hp, 4*Hp)

    # ---- 2) Sequential time recurrence; h/c state kept in f32.
    def step(t, carry):
        h, c = carry
        gates = xw_s[t] + jnp.dot(h.astype(whh.dtype), whh,
                                  preferred_element_type=jnp.float32)
        i_g = _sigmoid(gates[:, 0 * Hp:1 * Hp])
        f_g = _sigmoid(gates[:, 1 * Hp:2 * Hp])
        g_g = jnp.tanh(gates[:, 2 * Hp:3 * Hp])
        o_g = _sigmoid(gates[:, 3 * Hp:4 * Hp])
        c = f_g * c + i_g * g_g
        h = o_g * jnp.tanh(c)
        hs_s[t] = h
        return (h, c)

    h, c = lax.fori_loop(0, T, step, (h0_ref[...], c0_ref[...]),
                         unroll=(T <= 16))

    hn_ref[...] = h
    cn_ref[...] = c

    # ---- 3) Output Linear over all timesteps at once.
    hs = hs_s[...].reshape(T * TB, Hp)
    y = jnp.dot(hs.astype(wfc_ref.dtype), wfc_ref[...],
                preferred_element_type=jnp.float32) + bfc_ref[...]
    out_ref[...] = y.reshape(T, TB, Out_p)


def _pad_gate_weight_T(w, in_dim, H, in_p, Hp, dtype):
    """PyTorch (4H, in_dim) gate weight -> padded, transposed (in_p, 4*Hp)."""
    out = jnp.zeros((in_p, 4 * Hp), dtype)
    for k in range(4):
        blk = w[k * H:(k + 1) * H, :].T.astype(dtype)   # (in_dim, H)
        out = out.at[:in_dim, k * Hp:k * Hp + H].set(blk)
    return out


def lstm_model_forward(X, params, h_0=None, c_0=None):
    """Pallas forward of LSTMModel.forward.

    X:        (B, T*input_size) or (B, T, input_size)
    h_0/c_0:  optional (1, B, H); default zeros (as in the module)
    returns   (output (B, T, Out), (hn (1, B, H), cn (1, B, H)))
    """
    w_ih, w_hh = params["w_ih"], params["w_hh"]
    b_ih, b_hh = params["b_ih"], params["b_hh"]
    w_fc, b_fc = params["w_fc"], params["b_fc"]
    In = w_ih.shape[1]
    H = w_hh.shape[1]
    Out = w_fc.shape[0]

    B = X.shape[0]
    inputs = jnp.asarray(X, jnp.float32).reshape(B, -1, In)   # X.view(B, -1, 3+2)
    T = inputs.shape[1]

    # ---- pad to MXU / vreg friendly sizes: lanes multiple of 128, sublanes of 8
    In_p = _round_up(In, 128)
    Hp = _round_up(H, 128)
    Out_p = _round_up(Out, 128)
    B8 = _round_up(B, 8)
    TILE_B = B8 if B8 <= 128 else 128
    Bp = _round_up(B, TILE_B)

    cdt = jnp.bfloat16   # matmul-operand dtype; accumulation stays f32 in-kernel

    # time-major padded input (T, Bp, In_p)
    x_p = jnp.zeros((T, Bp, In_p), cdt)
    x_p = x_p.at[:, :B, :In].set(jnp.transpose(inputs, (1, 0, 2)).astype(cdt))

    wih_p = _pad_gate_weight_T(w_ih, In, H, In_p, Hp, cdt)
    whh_p = _pad_gate_weight_T(w_hh, H, H, Hp, Hp, cdt)
    bg = jnp.zeros((1, 4 * Hp), jnp.float32)
    for k in range(4):
        bg = bg.at[0, k * Hp:k * Hp + H].set(
            (b_ih[k * H:(k + 1) * H] + b_hh[k * H:(k + 1) * H]).astype(jnp.float32))
    wfc_p = jnp.zeros((Hp, Out_p), cdt).at[:H, :Out].set(w_fc.T.astype(cdt))
    bfc_p = jnp.zeros((1, Out_p), jnp.float32).at[0, :Out].set(
        b_fc.astype(jnp.float32))

    h0_p = jnp.zeros((Bp, Hp), jnp.float32)
    c0_p = jnp.zeros((Bp, Hp), jnp.float32)
    if h_0 is not None:
        h0_p = h0_p.at[:B, :H].set(jnp.asarray(h_0, jnp.float32).reshape(B, H))
    if c_0 is not None:
        c0_p = c0_p.at[:B, :H].set(jnp.asarray(c_0, jnp.float32).reshape(B, H))

    grid = (Bp // TILE_B,)

    out_p, hn_p, cn_p = pl.pallas_call(
        _lstm_kernel,
        out_shape=(
            jax.ShapeDtypeStruct((T, Bp, Out_p), jnp.float32),
            jax.ShapeDtypeStruct((Bp, Hp), jnp.float32),
            jax.ShapeDtypeStruct((Bp, Hp), jnp.float32),
        ),
        grid=grid,
        in_specs=[
            pl.BlockSpec((T, TILE_B, In_p), lambda i: (0, i, 0)),   # x (time-major)
            pl.BlockSpec((TILE_B, Hp), lambda i: (i, 0)),           # h0
            pl.BlockSpec((TILE_B, Hp), lambda i: (i, 0)),           # c0
            pl.BlockSpec((In_p, 4 * Hp), lambda i: (0, 0)),         # W_ih^T (resident)
            pl.BlockSpec((Hp, 4 * Hp), lambda i: (0, 0)),           # W_hh^T (resident)
            pl.BlockSpec((1, 4 * Hp), lambda i: (0, 0)),            # fused gate bias
            pl.BlockSpec((Hp, Out_p), lambda i: (0, 0)),            # W_fc^T (resident)
            pl.BlockSpec((1, Out_p), lambda i: (0, 0)),             # fc bias
        ],
        out_specs=(
            pl.BlockSpec((T, TILE_B, Out_p), lambda i: (0, i, 0)),  # output, all t
            pl.BlockSpec((TILE_B, Hp), lambda i: (i, 0)),           # hn
            pl.BlockSpec((TILE_B, Hp), lambda i: (i, 0)),           # cn
        ),
        scratch_shapes=[
            pltpu.VMEM((T, TILE_B, 4 * Hp), jnp.float32),   # x @ W_ih + b, all t
            pltpu.VMEM((T, TILE_B, Hp), jnp.float32),       # h_t for all t
        ],
        compiler_params=pltpu.CompilerParams(
            dimension_semantics=("parallel",),
        ),
    )(x_p, h0_p, c0_p, wih_p, whh_p, bg, wfc_p, bfc_p)

    output = jnp.transpose(out_p, (1, 0, 2))[:B, :, :Out]   # (B, T, Out)
    hn = hn_p[:B, :H].reshape(1, B, H)
    cn = cn_p[:B, :H].reshape(1, B, H)
    return output, (hn, cn)


def init_params(key, input_size, hidden_size, output_size):
    """PyTorch-layout parameters with nn.LSTM / nn.Linear default init."""
    H, In, Out = hidden_size, input_size, output_size
    k_lstm = 1.0 / jnp.sqrt(jnp.float32(H))
    k_fc = 1.0 / jnp.sqrt(jnp.float32(H))
    ks = jax.random.split(key, 6)
    return {
        "w_ih": jax.random.uniform(ks[0], (4 * H, In), jnp.float32, -k_lstm, k_lstm),
        "w_hh": jax.random.uniform(ks[1], (4 * H, H), jnp.float32, -k_lstm, k_lstm),
        "b_ih": jax.random.uniform(ks[2], (4 * H,), jnp.float32, -k_lstm, k_lstm),
        "b_hh": jax.random.uniform(ks[3], (4 * H,), jnp.float32, -k_lstm, k_lstm),
        "w_fc": jax.random.uniform(ks[4], (Out, H), jnp.float32, -k_fc, k_fc),
        "b_fc": jax.random.uniform(ks[5], (Out,), jnp.float32, -k_fc, k_fc),
    }


def reference_forward(X, params, h_0=None, c_0=None):
    """Plain-JAX (f32) reference of LSTMModel.forward."""
    w_ih, w_hh = params["w_ih"], params["w_hh"]
    b_ih, b_hh = params["b_ih"], params["b_hh"]
    w_fc, b_fc = params["w_fc"], params["b_fc"]
    In = w_ih.shape[1]
    H = w_hh.shape[1]
    B = X.shape[0]
    x = jnp.asarray(X, jnp.float32).reshape(B, -1, In)
    T = x.shape[1]
    h = (jnp.zeros((B, H), jnp.float32) if h_0 is None
         else jnp.asarray(h_0, jnp.float32).reshape(B, H))
    c = (jnp.zeros((B, H), jnp.float32) if c_0 is None
         else jnp.asarray(c_0, jnp.float32).reshape(B, H))
    outs = []
    for t in range(T):
        gates = x[:, t, :] @ w_ih.T + b_ih + h @ w_hh.T + b_hh
        i = jax.nn.sigmoid(gates[:, 0 * H:1 * H])
        f = jax.nn.sigmoid(gates[:, 1 * H:2 * H])
        g = jnp.tanh(gates[:, 2 * H:3 * H])
        o = jax.nn.sigmoid(gates[:, 3 * H:4 * H])
        c = f * c + i * g
        h = o * jnp.tanh(c)
        outs.append(h)
    lstm_out = jnp.stack(outs, axis=1)          # (B, T, H)
    out = lstm_out @ w_fc.T + b_fc
    return out, (h.reshape(1, B, H), c.reshape(1, B, H))


if __name__ == "__main__":
    input_size = 3 + 2        # the module views X as (B, -1, 3 + 2)
    hidden_size = 32
    output_size = 3
    batch = 2
    seq_len = 8

    key = jax.random.PRNGKey(0)
    key, kx = jax.random.split(key)
    X = jax.random.normal(kx, (batch, seq_len * input_size), jnp.float32)
    params = init_params(key, input_size, hidden_size, output_size)

    out, (hn, cn) = lstm_model_forward(X, params)
    out = jax.block_until_ready(out)

    ref_out, (ref_hn, ref_cn) = reference_forward(X, params)
    assert out.shape == (batch, seq_len, output_size)
    assert hn.shape == (1, batch, hidden_size)
    assert cn.shape == (1, batch, hidden_size)
    # bf16 matmul operands with f32 accumulation -> modest tolerance vs f32 ref.
    assert jnp.allclose(out, ref_out, atol=2e-2, rtol=2e-2)
    assert jnp.allclose(hn, ref_hn, atol=2e-2, rtol=2e-2)
    assert jnp.allclose(cn, ref_cn, atol=2e-2, rtol=2e-2)

    print("KERNEL_OK")
</pallas_src>

<mosaic_0001>
module attributes {stable_mosaic.version = 11 : i64} {
  func.func @_lstm_kernel(%arg0: i32, %arg1: memref<8x8x128xbf16, #tpu.memory_space<vmem>>, %arg2: memref<8x128xf32, #tpu.memory_space<vmem>>, %arg3: memref<8x128xf32, #tpu.memory_space<vmem>>, %arg4: memref<128x512xbf16, #tpu.memory_space<vmem>>, %arg5: memref<128x512xbf16, #tpu.memory_space<vmem>>, %arg6: memref<1x512xf32, #tpu.memory_space<vmem>>, %arg7: memref<128x128xbf16, #tpu.memory_space<vmem>>, %arg8: memref<1x128xf32, #tpu.memory_space<vmem>>, %arg9: memref<8x8x128xf32, #tpu.memory_space<vmem>>, %arg10: memref<8x128xf32, #tpu.memory_space<vmem>>, %arg11: memref<8x128xf32, #tpu.memory_space<vmem>>, %arg12: memref<8x8x512xf32, #tpu.memory_space<vmem>>, %arg13: memref<8x8x128xf32, #tpu.memory_space<vmem>>) attributes {dimension_semantics = [#tpu.dimension_semantics<parallel>], iteration_bounds = array<i64: 1>, scalar_prefetch = 0 : i64, scratch_operands = 2 : i64, tpu.core_type = #tpu.core_type<tc>, window_params = [{transform_indices = @transform_0, window_bounds = array<i64: 8, 8, 128>}, {transform_indices = @transform_1, window_bounds = array<i64: 8, 128>}, {transform_indices = @transform_2, window_bounds = array<i64: 8, 128>}, {pipeline_mode = #tpu.pipeline_mode<synchronous>, transform_indices = @transform_3, window_bounds = array<i64: 128, 512>}, {pipeline_mode = #tpu.pipeline_mode<synchronous>, transform_indices = @transform_4, window_bounds = array<i64: 128, 512>}, {pipeline_mode = #tpu.pipeline_mode<synchronous>, transform_indices = @transform_5, window_bounds = array<i64: 1, 512>}, {pipeline_mode = #tpu.pipeline_mode<synchronous>, transform_indices = @transform_6, window_bounds = array<i64: 128, 128>}, {pipeline_mode = #tpu.pipeline_mode<synchronous>, transform_indices = @transform_7, window_bounds = array<i64: 1, 128>}, {transform_indices = @transform_8, window_bounds = array<i64: 8, 8, 128>}, {transform_indices = @transform_9, window_bounds = array<i64: 8, 128>}, {transform_indices = @transform_10, window_bounds = array<i64: 8, 128>}]} {
    %c0 = arith.constant 0 : index
    %c0_0 = arith.constant 0 : index
    %c0_1 = arith.constant 0 : index
    %0 = vector.load %arg1[%c0, %c0_0, %c0_1] : memref<8x8x128xbf16, #tpu.memory_space<vmem>>, vector<8x8x128xbf16>
    %1 = vector.shape_cast %0 : vector<8x8x128xbf16> to vector<64x128xbf16>
    %c0_2 = arith.constant 0 : index
    %c0_3 = arith.constant 0 : index
    %2 = vector.load %arg4[%c0_2, %c0_3] : memref<128x512xbf16, #tpu.memory_space<vmem>>, vector<128x512xbf16>
    %cst = arith.constant dense<0.000000e+00> : vector<64x512xf32>
    %3 = tpu.matmul %1, %2, %cst {dimension_numbers = #tpu.dot_dimension_numbers<[1], [0], [0], [1], [0, 0, 1, 1], [], []>} : vector<64x128xbf16>, vector<128x512xbf16>, vector<64x512xf32> -> vector<64x512xf32>
    %c0_4 = arith.constant 0 : index
    %c0_5 = arith.constant 0 : index
    %4 = vector.load %arg6[%c0_4, %c0_5] : memref<1x512xf32, #tpu.memory_space<vmem>>, vector<1x512xf32>
    %5 = vector.broadcast %4 : vector<1x512xf32> to vector<64x512xf32>
    %6 = arith.addf %3, %5 : vector<64x512xf32>
    %7 = vector.shape_cast %6 : vector<64x512xf32> to vector<8x8x512xf32>
    %c0_6 = arith.constant 0 : index
    %c0_7 = arith.constant 0 : index
    %c0_8 = arith.constant 0 : index
    %8 = vector.load %arg12[%c0_6, %c0_7, %c0_8] : memref<8x8x512xf32, #tpu.memory_space<vmem>>, vector<8x8x512xf32>
    tpu.vector_store %arg12[%c0_6, %c0_7, %c0_8], %7 {strides = array<i32>} : memref<8x8x512xf32, #tpu.memory_space<vmem>>, vector<8x8x512xf32>,
    %c0_9 = arith.constant 0 : index
    %c0_10 = arith.constant 0 : index
    %9 = vector.load %arg5[%c0_9, %c0_10] : memref<128x512xbf16, #tpu.memory_space<vmem>>, vector<128x512xbf16>
    %c0_11 = arith.constant 0 : index
    %c0_12 = arith.constant 0 : index
    %10 = vector.load %arg2[%c0_11, %c0_12] : memref<8x128xf32, #tpu.memory_space<vmem>>, vector<8x128xf32>
    %c0_13 = arith.constant 0 : index
    %c0_14 = arith.constant 0 : index
    %11 = vector.load %arg3[%c0_13, %c0_14] : memref<8x128xf32, #tpu.memory_space<vmem>>, vector<8x128xf32>
    %c0_i32 = arith.constant 0 : i32
    %12 = arith.index_cast %c0_i32 : i32 to index
    %c0_15 = arith.constant 0 : index
    %c0_16 = arith.constant 0 : index
    %13 = vector.load %arg12[%12, %c0_15, %c0_16] : memref<8x8x512xf32, #tpu.memory_space<vmem>>, vector<1x8x512xf32>
    %14 = vector.shape_cast %13 : vector<1x8x512xf32> to vector<8x512xf32>
    %15 = arith.truncf %10 : vector<8x128xf32> to vector<8x128xbf16>
    %cst_17 = arith.constant dense<0.000000e+00> : vector<8x512xf32>
    %16 = tpu.matmul %15, %9, %cst_17 {dimension_numbers = #tpu.dot_dimension_numbers<[1], [0], [0], [1], [0, 0, 1, 1], [], []>} : vector<8x128xbf16>, vector<128x512xbf16>, vector<8x512xf32> -> vector<8x512xf32>
    %17 = arith.addf %14, %16 : vector<8x512xf32>
    %18 = vector.extract_strided_slice %17 {offsets = [0, 0], sizes = [8, 128], strides = [1, 1]} : vector<8x512xf32> to vector<8x128xf32>
    %cst_18 = arith.constant 0.000000e+00 : f32
    %19 = vector.broadcast %cst_18 : f32 to vector<8x128xf32>
    %20 = arith.subf %19, %18 : vector<8x128xf32>
    %21 = math.exp %20 : vector<8x128xf32>
    %cst_19 = arith.constant 1.000000e+00 : f32
    %22 = vector.broadcast %cst_19 : f32 to vector<8x128xf32>
    %23 = arith.addf %22, %21 : vector<8x128xf32>
    %cst_20 = arith.constant 1.000000e+00 : f32
    %24 = vector.broadcast %cst_20 : f32 to vector<8x128xf32>
    %25 = arith.divf %24, %23 : vector<8x128xf32>
    %26 = vector.extract_strided_slice %17 {offsets = [0, 128], sizes = [8, 128], strides = [1, 1]} : vector<8x512xf32> to vector<8x128xf32>
    %cst_21 = arith.constant 0.000000e+00 : f32
    %27 = vector.broadcast %cst_21 : f32 to vector<8x128xf32>
    %28 = arith.subf %27, %26 : vector<8x128xf32>
    %29 = math.exp %28 : vector<8x128xf32>
    %cst_22 = arith.constant 1.000000e+00 : f32
    %30 = vector.broadcast %cst_22 : f32 to vector<8x128xf32>
    %31 = arith.addf %30, %29 : vector<8x128xf32>
    %cst_23 = arith.constant 1.000000e+00 : f32
    %32 = vector.broadcast %cst_23 : f32 to vector<8x128xf32>
    %33 = arith.divf %32, %31 : vector<8x128xf32>
    %34 = vector.extract_strided_slice %17 {offsets = [0, 256], sizes = [8, 128], strides = [1, 1]} : vector<8x512xf32> to vector<8x128xf32>
    %35 = math.tanh %34 : vector<8x128xf32>
    %36 = vector.extract_strided_slice %17 {offsets = [0, 384], sizes = [8, 128], strides = [1, 1]} : vector<8x512xf32> to vector<8x128xf32>
    %cst_24 = arith.constant 0.000000e+00 : f32
    %37 = vector.broadcast %cst_24 : f32 to vector<8x128xf32>
    %38 = arith.subf %37, %36 : vector<8x128xf32>
    %39 = math.exp %38 : vector<8x128xf32>
    %cst_25 = arith.constant 1.000000e+00 : f32
    %40 = vector.broadcast %cst_25 : f32 to vector<8x128xf32>
    %41 = arith.addf %40, %39 : vector<8x128xf32>
    %cst_26 = arith.constant 1.000000e+00 : f32
    %42 = vector.broadcast %cst_26 : f32 to vector<8x128xf32>
    %43 = arith.divf %42, %41 : vector<8x128xf32>
    %44 = arith.mulf %33, %11 : vector<8x128xf32>
    %45 = arith.mulf %25, %35 : vector<8x128xf32>
    %46 = arith.addf %44, %45 : vector<8x128xf32>
    %47 = math.tanh %46 : vector<8x128xf32>
    %48 = arith.mulf %43, %47 : vector<8x128xf32>
    %49 = arith.index_cast %c0_i32 : i32 to index
    %c0_27 = arith.constant 0 : index
    %c0_28 = arith.constant 0 : index
    %50 = vector.load %arg13[%49, %c0_27, %c0_28] : memref<8x8x128xf32, #tpu.memory_space<vmem>>, vector<1x8x128xf32>
    %51 = vector.shape_cast %50 : vector<1x8x128xf32> to vector<8x128xf32>
    %52 = vector.shape_cast %48 : vector<8x128xf32> to vector<1x8x128xf32>
    tpu.vector_store %arg13[%49, %c0_27, %c0_28], %52 {strides = array<i32>} : memref<8x8x128xf32, #tpu.memory_space<vmem>>, vector<1x8x128xf32>,
    %c1_i32 = arith.constant 1 : i32
    %53 = arith.index_cast %c1_i32 : i32 to index
    %c0_29 = arith.constant 0 : index
    %c0_30 = arith.constant 0 : index
    %54 = vector.load %arg12[%53, %c0_29, %c0_30] : memref<8x8x512xf32, #tpu.memory_space<vmem>>, vector<1x8x512xf32>
    %55 = vector.shape_cast %54 : vector<1x8x512xf32> to vector<8x512xf32>
    %56 = arith.truncf %48 : vector<8x128xf32> to vector<8x128xbf16>
    %cst_31 = arith.constant dense<0.000000e+00> : vector<8x512xf32>
    %57 = tpu.matmul %56, %9, %cst_31 {dimension_numbers = #tpu.dot_dimension_numbers<[1], [0], [0], [1], [0, 0, 1, 1], [], []>} : vector<8x128xbf16>, vector<128x512xbf16>, vector<8x512xf32> -> vector<8x512xf32>
    %58 = arith.addf %55, %57 : vector<8x512xf32>
    %59 = vector.extract_strided_slice %58 {offsets = [0, 0], sizes = [8, 128], strides = [1, 1]} : vector<8x512xf32> to vector<8x128xf32>
    %cst_32 = arith.constant 0.000000e+00 : f32
    %60 = vector.broadcast %cst_32 : f32 to vector<8x128xf32>
    %61 = arith.subf %60, %59 : vector<8x128xf32>
    %62 = math.exp %61 : vector<8x128xf32>
    %cst_33 = arith.constant 1.000000e+00 : f32
    %63 = vector.broadcast %cst_33 : f32 to vector<8x128xf32>
    %64 = arith.addf %63, %62 : vector<8x128xf32>
    %cst_34 = arith.constant 1.000000e+00 : f32
    %65 = vector.broadcast %cst_34 : f32 to vector<8x128xf32>
    %66 = arith.divf %65, %64 : vector<8x128xf32>
    %67 = vector.extract_strided_slice %58 {offsets = [0, 128], sizes = [8, 128], strides = [1, 1]} : vector<8x512xf32> to vector<8x128xf32>
    %cst_35 = arith.constant 0.000000e+00 : f32
    %68 = vector.broadcast %cst_35 : f32 to vector<8x128xf32>
    %69 = arith.subf %68, %67 : vector<8x128xf32>
    %70 = math.exp %69 : vector<8x128xf32>
    %cst_36 = arith.constant 1.000000e+00 : f32
    %71 = vector.broadcast %cst_36 : f32 to vector<8x128xf32>
    %72 = arith.addf %71, %70 : vector<8x128xf32>
    %cst_37 = arith.constant 1.000000e+00 : f32
    %73 = vector.broadcast %cst_37 : f32 to vector<8x128xf32>
    %74 = arith.divf %73, %72 : vector<8x128xf32>
    %75 = vector.extract_strided_slice %58 {offsets = [0, 256], sizes = [8, 128], strides = [1, 1]} : vector<8x512xf32> to vector<8x128xf32>
    %76 = math.tanh %75 : vector<8x128xf32>
    %77 = vector.extract_strided_slice %58 {offsets = [0, 384], sizes = [8, 128], strides = [1, 1]} : vector<8x512xf32> to vector<8x128xf32>
    %cst_38 = arith.constant 0.000000e+00 : f32
    %78 = vector.broadcast %cst_38 : f32 to vector<8x128xf32>
    %79 = arith.subf %78, %77 : vector<8x128xf32>
    %80 = math.exp %79 : vector<8x128xf32>
    %cst_39 = arith.constant 1.000000e+00 : f32
    %81 = vector.broadcast %cst_39 : f32 to vector<8x128xf32>
    %82 = arith.addf %81, %80 : vector<8x128xf32>
    %cst_40 = arith.constant 1.000000e+00 : f32
    %83 = vector.broadcast %cst_40 : f32 to vector<8x128xf32>
    %84 = arith.divf %83, %82 : vector<8x128xf32>
    %85 = arith.mulf %74, %46 : vector<8x128xf32>
    %86 = arith.mulf %66, %76 : vector<8x128xf32>
    %87 = arith.addf %85, %86 : vector<8x128xf32>
    %88 = math.tanh %87 : vector<8x128xf32>
    %89 = arith.mulf %84, %88 : vector<8x128xf32>
    %90 = arith.index_cast %c1_i32 : i32 to index
    %c0_41 = arith.constant 0 : index
    %c0_42 = arith.constant 0 : index
    %91 = vector.load %arg13[%90, %c0_41, %c0_42] : memref<8x8x128xf32, #tpu.memory_space<vmem>>, vector<1x8x128xf32>
    %92 = vector.shape_cast %91 : vector<1x8x128xf32> to vector<8x128xf32>
    %93 = vector.shape_cast %89 : vector<8x128xf32> to vector<1x8x128xf32>
    tpu.vector_store %arg13[%90, %c0_41, %c0_42], %93 {strides = array<i32>} : memref<8x8x128xf32, #tpu.memory_space<vmem>>, vector<1x8x128xf32>,
    %c2_i32 = arith.constant 2 : i32
    %94 = arith.index_cast %c2_i32 : i32 to index
    %c0_43 = arith.constant 0 : index
    %c0_44 = arith.constant 0 : index
    %95 = vector.load %arg12[%94, %c0_43, %c0_44] : memref<8x8x512xf32, #tpu.memory_space<vmem>>, vector<1x8x512xf32>
    %96 = vector.shape_cast %95 : vector<1x8x512xf32> to vector<8x512xf32>
    %97 = arith.truncf %89 : vector<8x128xf32> to vector<8x128xbf16>
    %cst_45 = arith.constant dense<0.000000e+00> : vector<8x512xf32>
    %98 = tpu.matmul %97, %9, %cst_45 {dimension_numbers = #tpu.dot_dimension_numbers<[1], [0], [0], [1], [0, 0, 1, 1], [], []>} : vector<8x128xbf16>, vector<128x512xbf16>, vector<8x512xf32> -> vector<8x512xf32>
    %99 = arith.addf %96, %98 : vector<8x512xf32>
    %100 = vector.extract_strided_slice %99 {offsets = [0, 0], sizes = [8, 128], strides = [1, 1]} : vector<8x512xf32> to vector<8x128xf32>
    %cst_46 = arith.constant 0.000000e+00 : f32
    %101 = vector.broadcast %cst_46 : f32 to vector<8x128xf32>
    %102 = arith.subf %101, %100 : vector<8x128xf32>
    %103 = math.exp %102 : vector<8x128xf32>
    %cst_47 = arith.constant 1.000000e+00 : f32
    %104 = vector.broadcast %cst_47 : f32 to vector<8x128xf32>
    %105 = arith.addf %104, %103 : vector<8x128xf32>
    %cst_48 = arith.constant 1.000000e+00 : f32
    %106 = vector.broadcast %cst_48 : f32 to vector<8x128xf32>
    %107 = arith.divf %106, %105 : vector<8x128xf32>
    %108 = vector.extract_strided_slice %99 {offsets = [0, 128], sizes = [8, 128], strides = [1, 1]} : vector<8x512xf32> to vector<8x128xf32>
    %cst_49 = arith.constant 0.000000e+00 : f32
    %109 = vector.broadcast %cst_49 : f32 to vector<8x128xf32>
    %110 = arith.subf %109, %108 : vector<8x128xf32>
    %111 = math.exp %110 : vector<8x128xf32>
    %cst_50 = arith.constant 1.000000e+00 : f32
    %112 = vector.broadcast %cst_50 : f32 to vector<8x128xf32>
    %113 = arith.addf %112, %111 : vector<8x128xf32>
    %cst_51 = arith.constant 1.000000e+00 : f32
    %114 = vector.broadcast %cst_51 : f32 to vector<8x128xf32>
    %115 = arith.divf %114, %113 : vector<8x128xf32>
    %116 = vector.extract_strided_slice %99 {offsets = [0, 256], sizes = [8, 128], strides = [1, 1]} : vector<8x512xf32> to vector<8x128xf32>
    %117 = math.tanh %116 : vector<8x128xf32>
    %118 = vector.extract_strided_slice %99 {offsets = [0, 384], sizes = [8, 128], strides = [1, 1]} : vector<8x512xf32> to vector<8x128xf32>
    %cst_52 = arith.constant 0.000000e+00 : f32
    %119 = vector.broadcast %cst_52 : f32 to vector<8x128xf32>
    %120 = arith.subf %119, %118 : vector<8x128xf32>
    %121 = math.exp %120 : vector<8x128xf32>
    %cst_53 = arith.constant 1.000000e+00 : f32
    %122 = vector.broadcast %cst_53 : f32 to vector<8x128xf32>
    %123 = arith.addf %122, %121 : vector<8x128xf32>
    %cst_54 = arith.constant 1.000000e+00 : f32
    %124 = vector.broadcast %cst_54 : f32 to vector<8x128xf32>
    %125 = arith.divf %124, %123 : vector<8x128xf32>
    %126 = arith.mulf %115, %87 : vector<8x128xf32>
    %127 = arith.mulf %107, %117 : vector<8x128xf32>
    %128 = arith.addf %126, %127 : vector<8x128xf32>
    %129 = math.tanh %128 : vector<8x128xf32>
    %130 = arith.mulf %125, %129 : vector<8x128xf32>
    %131 = arith.index_cast %c2_i32 : i32 to index
    %c0_55 = arith.constant 0 : index
    %c0_56 = arith.constant 0 : index
    %132 = vector.load %arg13[%131, %c0_55, %c0_56] : memref<8x8x128xf32, #tpu.memory_space<vmem>>, vector<1x8x128xf32>
    %133 = vector.shape_cast %132 : vector<1x8x128xf32> to vector<8x128xf32>
    %134 = vector.shape_cast %130 : vector<8x128xf32> to vector<1x8x128xf32>
    tpu.vector_store %arg13[%131, %c0_55, %c0_56], %134 {strides = array<i32>} : memref<8x8x128xf32, #tpu.memory_space<vmem>>, vector<1x8x128xf32>,
    %c3_i32 = arith.constant 3 : i32
    %135 = arith.index_cast %c3_i32 : i32 to index
    %c0_57 = arith.constant 0 : index
    %c0_58 = arith.constant 0 : index
    %136 = vector.load %arg12[%135, %c0_57, %c0_58] : memref<8x8x512xf32, #tpu.memory_space<vmem>>, vector<1x8x512xf32>
    %137 = vector.shape_cast %136 : vector<1x8x512xf32> to vector<8x512xf32>
    %138 = arith.truncf %130 : vector<8x128xf32> to vector<8x128xbf16>
    %cst_59 = arith.constant dense<0.000000e+00> : vector<8x512xf32>
    %139 = tpu.matmul %138, %9, %cst_59 {dimension_numbers = #tpu.dot_dimension_numbers<[1], [0], [0], [1], [0, 0, 1, 1], [], []>} : vector<8x128xbf16>, vector<128x512xbf16>, vector<8x512xf32> -> vector<8x512xf32>
    %140 = arith.addf %137, %139 : vector<8x512xf32>
    %141 = vector.extract_strided_slice %140 {offsets = [0, 0], sizes = [8, 128], strides = [1, 1]} : vector<8x512xf32> to vector<8x128xf32>
    %cst_60 = arith.constant 0.000000e+00 : f32
    %142 = vector.broadcast %cst_60 : f32 to vector<8x128xf32>
    %143 = arith.subf %142, %141 : vector<8x128xf32>
    %144 = math.exp %143 : vector<8x128xf32>
    %cst_61 = arith.constant 1.000000e+00 : f32
    %145 = vector.broadcast %cst_61 : f32 to vector<8x128xf32>
    %146 = arith.addf %145, %144 : vector<8x128xf32>
    %cst_62 = arith.constant 1.000000e+00 : f32
    %147 = vector.broadcast %cst_62 : f32 to vector<8x128xf32>
    %148 = arith.divf %147, %146 : vector<8x128xf32>
    %149 = vector.extract_strided_slice %140 {offsets = [0, 128], sizes = [8, 128], strides = [1, 1]} : vector<8x512xf32> to vector<8x128xf32>
    %cst_63 = arith.constant 0.000000e+00 : f32
    %150 = vector.broadcast %cst_63 : f32 to vector<8x128xf32>
    %151 = arith.subf %150, %149 : vector<8x128xf32>
    %152 = math.exp %151 : vector<8x128xf32>
    %cst_64 = arith.constant 1.000000e+00 : f32
    %153 = vector.broadcast %cst_64 : f32 to vector<8x128xf32>
    %154 = arith.addf %153, %152 : vector<8x128xf32>
    %cst_65 = arith.constant 1.000000e+00 : f32
    %155 = vector.broadcast %cst_65 : f32 to vector<8x128xf32>
    %156 = arith.divf %155, %154 : vector<8x128xf32>
    %157 = vector.extract_strided_slice %140 {offsets = [0, 256], sizes = [8, 128], strides = [1, 1]} : vector<8x512xf32> to vector<8x128xf32>
    %158 = math.tanh %157 : vector<8x128xf32>
    %159 = vector.extract_strided_slice %140 {offsets = [0, 384], sizes = [8, 128], strides = [1, 1]} : vector<8x512xf32> to vector<8x128xf32>
    %cst_66 = arith.constant 0.000000e+00 : f32
    %160 = vector.broadcast %cst_66 : f32 to vector<8x128xf32>
    %161 = arith.subf %160, %159 : vector<8x128xf32>
    %162 = math.exp %161 : vector<8x128xf32>
    %cst_67 = arith.constant 1.000000e+00 : f32
    %163 = vector.broadcast %cst_67 : f32 to vector<8x128xf32>
    %164 = arith.addf %163, %162 : vector<8x128xf32>
    %cst_68 = arith.constant 1.000000e+00 : f32
    %165 = vector.broadcast %cst_68 : f32 to vector<8x128xf32>
    %166 = arith.divf %165, %164 : vector<8x128xf32>
    %167 = arith.mulf %156, %128 : vector<8x128xf32>
    %168 = arith.mulf %148, %158 : vector<8x128xf32>
    %169 = arith.addf %167, %168 : vector<8x128xf32>
    %170 = math.tanh %169 : vector<8x128xf32>
    %171 = arith.mulf %166, %170 : vector<8x128xf32>
    %172 = arith.index_cast %c3_i32 : i32 to index
    %c0_69 = arith.constant 0 : index
    %c0_70 = arith.constant 0 : index
    %173 = vector.load %arg13[%172, %c0_69, %c0_70] : memref<8x8x128xf32, #tpu.memory_space<vmem>>, vector<1x8x128xf32>
    %174 = vector.shape_cast %173 : vector<1x8x128xf32> to vector<8x128xf32>
    %175 = vector.shape_cast %171 : vector<8x128xf32> to vector<1x8x128xf32>
    tpu.vector_store %arg13[%172, %c0_69, %c0_70], %175 {strides = array<i32>} : memref<8x8x128xf32, #tpu.memory_space<vmem>>, vector<1x8x128xf32>,
    %c4_i32 = arith.constant 4 : i32
    %176 = arith.index_cast %c4_i32 : i32 to index
    %c0_71 = arith.constant 0 : index
    %c0_72 = arith.constant 0 : index
    %177 = vector.load %arg12[%176, %c0_71, %c0_72] : memref<8x8x512xf32, #tpu.memory_space<vmem>>, vector<1x8x512xf32>
    %178 = vector.shape_cast %177 : vector<1x8x512xf32> to vector<8x512xf32>
    %179 = arith.truncf %171 : vector<8x128xf32> to vector<8x128xbf16>
    %cst_73 = arith.constant dense<0.000000e+00> : vector<8x512xf32>
    %180 = tpu.matmul %179, %9, %cst_73 {dimension_numbers = #tpu.dot_dimension_numbers<[1], [0], [0], [1], [0, 0, 1, 1], [], []>} : vector<8x128xbf16>, vector<128x512xbf16>, vector<8x512xf32> -> vector<8x512xf32>
    %181 = arith.addf %178, %180 : vector<8x512xf32>
    %182 = vector.extract_strided_slice %181 {offsets = [0, 0], sizes = [8, 128], strides = [1, 1]} : vector<8x512xf32> to vector<8x128xf32>
    %cst_74 = arith.constant 0.000000e+00 : f32
    %183 = vector.broadcast %cst_74 : f32 to vector<8x128xf32>
    %184 = arith.subf %183, %182 : vector<8x128xf32>
    %185 = math.exp %184 : vector<8x128xf32>
    %cst_75 = arith.constant 1.000000e+00 : f32
    %186 = vector.broadcast %cst_75 : f32 to vector<8x128xf32>
    %187 = arith.addf %186, %185 : vector<8x128xf32>
    %cst_76 = arith.constant 1.000000e+00 : f32
    %188 = vector.broadcast %cst_76 : f32 to vector<8x128xf32>
    %189 = arith.divf %188, %187 : vector<8x128xf32>
    %190 = vector.extract_strided_slice %181 {offsets = [0, 128], sizes = [8, 128], strides = [1, 1]} : vector<8x512xf32> to vector<8x128xf32>
    %cst_77 = arith.constant 0.000000e+00 : f32
    %191 = vector.broadcast %cst_77 : f32 to vector<8x128xf32>
    %192 = arith.subf %191, %190 : vector<8x128xf32>
    %193 = math.exp %192 : vector<8x128xf32>
    %cst_78 = arith.constant 1.000000e+00 : f32
    %194 = vector.broadcast %cst_78 : f32 to vector<8x128xf32>
    %195 = arith.addf %194, %193 : vector<8x128xf32>
    %cst_79 = arith.constant 1.000000e+00 : f32
    %196 = vector.broadcast %cst_79 : f32 to vector<8x128xf32>
    %197 = arith.divf %196, %195 : vector<8x128xf32>
    %198 = vector.extract_strided_slice %181 {offsets = [0, 256], sizes = [8, 128], strides = [1, 1]} : vector<8x512xf32> to vector<8x128xf32>
    %199 = math.tanh %198 : vector<8x128xf32>
    %200 = vector.extract_strided_slice %181 {offsets = [0, 384], sizes = [8, 128], strides = [1, 1]} : vector<8x512xf32> to vector<8x128xf32>
    %cst_80 = arith.constant 0.000000e+00 : f32
    %201 = vector.broadcast %cst_80 : f32 to vector<8x128xf32>
    %202 = arith.subf %201, %200 : vector<8x128xf32>
    %203 = math.exp %202 : vector<8x128xf32>
    %cst_81 = arith.constant 1.000000e+00 : f32
    %204 = vector.broadcast %cst_81 : f32 to vector<8x128xf32>
    %205 = arith.addf %204, %203 : vector<8x128xf32>
    %cst_82 = arith.constant 1.000000e+00 : f32
    %206 = vector.broadcast %cst_82 : f32 to vector<8x128xf32>
    %207 = arith.divf %206, %205 : vector<8x128xf32>
    %208 = arith.mulf %197, %169 : vector<8x128xf32>
    %209 = arith.mulf %189, %199 : vector<8x128xf32>
    %210 = arith.addf %208, %209 : vector<8x128xf32>
    %211 = math.tanh %210 : vector<8x128xf32>
    %212 = arith.mulf %207, %211 : vector<8x128xf32>
    %213 = arith.index_cast %c4_i32 : i32 to index
    %c0_83 = arith.constant 0 : index
    %c0_84 = arith.constant 0 : index
    %214 = vector.load %arg13[%213, %c0_83, %c0_84] : memref<8x8x128xf32, #tpu.memory_space<vmem>>, vector<1x8x128xf32>
    %215 = vector.shape_cast %214 : vector<1x8x128xf32> to vector<8x128xf32>
    %216 = vector.shape_cast %212 : vector<8x128xf32> to vector<1x8x128xf32>
    tpu.vector_store %arg13[%213, %c0_83, %c0_84], %216 {strides = array<i32>} : memref<8x8x128xf32, #tpu.memory_space<vmem>>, vector<1x8x128xf32>,
    %c5_i32 = arith.constant 5 : i32
    %217 = arith.index_cast %c5_i32 : i32 to index
    %c0_85 = arith.constant 0 : index
    %c0_86 = arith.constant 0 : index
    %218 = vector.load %arg12[%217, %c0_85, %c0_86] : memref<8x8x512xf32, #tpu.memory_space<vmem>>, vector<1x8x512xf32>
    %219 = vector.shape_cast %218 : vector<1x8x512xf32> to vector<8x512xf32>
    %220 = arith.truncf %212 : vector<8x128xf32> to vector<8x128xbf16>
    %cst_87 = arith.constant dense<0.000000e+00> : vector<8x512xf32>
    %221 = tpu.matmul %220, %9, %cst_87 {dimension_numbers = #tpu.dot_dimension_numbers<[1], [0], [0], [1], [0, 0, 1, 1], [], []>} : vector<8x128xbf16>, vector<128x512xbf16>, vector<8x512xf32> -> vector<8x512xf32>
    %222 = arith.addf %219, %221 : vector<8x512xf32>
    %223 = vector.extract_strided_slice %222 {offsets = [0, 0], sizes = [8, 128], strides = [1, 1]} : vector<8x512xf32> to vector<8x128xf32>
    %cst_88 = arith.constant 0.000000e+00 : f32
    %224 = vector.broadcast %cst_88 : f32 to vector<8x128xf32>
    %225 = arith.subf %224, %223 : vector<8x128xf32>
    %226 = math.exp %225 : vector<8x128xf32>
    %cst_89 = arith.constant 1.000000e+00 : f32
    %227 = vector.broadcast %cst_89 : f32 to vector<8x128xf32>
    %228 = arith.addf %227, %226 : vector<8x128xf32>
    %cst_90 = arith.constant 1.000000e+00 : f32
    %229 = vector.broadcast %cst_90 : f32 to vector<8x128xf32>
    %230 = arith.divf %229, %228 : vector<8x128xf32>
    %231 = vector.extract_strided_slice %222 {offsets = [0, 128], sizes = [8, 128], strides = [1, 1]} : vector<8x512xf32> to vector<8x128xf32>
    %cst_91 = arith.constant 0.000000e+00 : f32
    %232 = vector.broadcast %cst_91 : f32 to vector<8x128xf32>
    %233 = arith.subf %232, %231 : vector<8x128xf32>
    %234 = math.exp %233 : vector<8x128xf32>
    %cst_92 = arith.constant 1.000000e+00 : f32
    %235 = vector.broadcast %cst_92 : f32 to vector<8x128xf32>
    %236 = arith.addf %235, %234 : vector<8x128xf32>
    %cst_93 = arith.constant 1.000000e+00 : f32
    %237 = vector.broadcast %cst_93 : f32 to vector<8x128xf32>
    %238 = arith.divf %237, %236 : vector<8x128xf32>
    %239 = vector.extract_strided_slice %222 {offsets = [0, 256], sizes = [8, 128], strides = [1, 1]} : vector<8x512xf32> to vector<8x128xf32>
    %240 = math.tanh %239 : vector<8x128xf32>
    %241 = vector.extract_strided_slice %222 {offsets = [0, 384], sizes = [8, 128], strides = [1, 1]} : vector<8x512xf32> to vector<8x128xf32>
    %cst_94 = arith.constant 0.000000e+00 : f32
    %242 = vector.broadcast %cst_94 : f32 to vector<8x128xf32>
    %243 = arith.subf %242, %241 : vector<8x128xf32>
    %244 = math.exp %243 : vector<8x128xf32>
    %cst_95 = arith.constant 1.000000e+00 : f32
    %245 = vector.broadcast %cst_95 : f32 to vector<8x128xf32>
    %246 = arith.addf %245, %244 : vector<8x128xf32>
    %cst_96 = arith.constant 1.000000e+00 : f32
    %247 = vector.broadcast %cst_96 : f32 to vector<8x128xf32>
    %248 = arith.divf %247, %246 : vector<8x128xf32>
    %249 = arith.mulf %238, %210 : vector<8x128xf32>
    %250 = arith.mulf %230, %240 : vector<8x128xf32>
    %251 = arith.addf %249, %250 : vector<8x128xf32>
    %252 = math.tanh %251 : vector<8x128xf32>
    %253 = arith.mulf %248, %252 : vector<8x128xf32>
    %254 = arith.index_cast %c5_i32 : i32 to index
    %c0_97 = arith.constant 0 : index
    %c0_98 = arith.constant 0 : index
    %255 = vector.load %arg13[%254, %c0_97, %c0_98] : memref<8x8x128xf32, #tpu.memory_space<vmem>>, vector<1x8x128xf32>
    %256 = vector.shape_cast %255 : vector<1x8x128xf32> to vector<8x128xf32>
    %257 = vector.shape_cast %253 : vector<8x128xf32> to vector<1x8x128xf32>
    tpu.vector_store %arg13[%254, %c0_97, %c0_98], %257 {strides = array<i32>} : memref<8x8x128xf32, #tpu.memory_space<vmem>>, vector<1x8x128xf32>,
    %c6_i32 = arith.constant 6 : i32
    %258 = arith.index_cast %c6_i32 : i32 to index
    %c0_99 = arith.constant 0 : index
    %c0_100 = arith.constant 0 : index
    %259 = vector.load %arg12[%258, %c0_99, %c0_100] : memref<8x8x512xf32, #tpu.memory_space<vmem>>, vector<1x8x512xf32>
    %260 = vector.shape_cast %259 : vector<1x8x512xf32> to vector<8x512xf32>
    %261 = arith.truncf %253 : vector<8x128xf32> to vector<8x128xbf16>
    %cst_101 = arith.constant dense<0.000000e+00> : vector<8x512xf32>
    %262 = tpu.matmul %261, %9, %cst_101 {dimension_numbers = #tpu.dot_dimension_numbers<[1], [0], [0], [1], [0, 0, 1, 1], [], []>} : vector<8x128xbf16>, vector<128x512xbf16>, vector<8x512xf32> -> vector<8x512xf32>
    %263 = arith.addf %260, %262 : vector<8x512xf32>
    %264 = vector.extract_strided_slice %263 {offsets = [0, 0], sizes = [8, 128], strides = [1, 1]} : vector<8x512xf32> to vector<8x128xf32>
    %cst_102 = arith.constant 0.000000e+00 : f32
    %265 = vector.broadcast %cst_102 : f32 to vector<8x128xf32>
    %266 = arith.subf %265, %264 : vector<8x128xf32>
    %267 = math.exp %266 : vector<8x128xf32>
    %cst_103 = arith.constant 1.000000e+00 : f32
    %268 = vector.broadcast %cst_103 : f32 to vector<8x128xf32>
    %269 = arith.addf %268, %267 : vector<8x128xf32>
    %cst_104 = arith.constant 1.000000e+00 : f32
    %270 = vector.broadcast %cst_104 : f32 to vector<8x128xf32>
    %271 = arith.divf %270, %269 : vector<8x128xf32>
    %272 = vector.extract_strided_slice %263 {offsets = [0, 128], sizes = [8, 128], strides = [1, 1]} : vector<8x512xf32> to vector<8x128xf32>
    %cst_105 = arith.constant 0.000000e+00 : f32
    %273 = vector.broadcast %cst_105 : f32 to vector<8x128xf32>
    %274 = arith.subf %273, %272 : vector<8x128xf32>
    %275 = math.exp %274 : vector<8x128xf32>
    %cst_106 = arith.constant 1.000000e+00 : f32
    %276 = vector.broadcast %cst_106 : f32 to vector<8x128xf32>
    %277 = arith.addf %276, %275 : vector<8x128xf32>
    %cst_107 = arith.constant 1.000000e+00 : f32
    %278 = vector.broadcast %cst_107 : f32 to vector<8x128xf32>
    %279 = arith.divf %278, %277 : vector<8x128xf32>
    %280 = vector.extract_strided_slice %263 {offsets = [0, 256], sizes = [8, 128], strides = [1, 1]} : vector<8x512xf32> to vector<8x128xf32>
    %281 = math.tanh %280 : vector<8x128xf32>
    %282 = vector.extract_strided_slice %263 {offsets = [0, 384], sizes = [8, 128], strides = [1, 1]} : vector<8x512xf32> to vector<8x128xf32>
    %cst_108 = arith.constant 0.000000e+00 : f32
    %283 = vector.broadcast %cst_108 : f32 to vector<8x128xf32>
    %284 = arith.subf %283, %282 : vector<8x128xf32>
    %285 = math.exp %284 : vector<8x128xf32>
    %cst_109 = arith.constant 1.000000e+00 : f32
    %286 = vector.broadcast %cst_109 : f32 to vector<8x128xf32>
    %287 = arith.addf %286, %285 : vector<8x128xf32>
    %cst_110 = arith.constant 1.000000e+00 : f32
    %288 = vector.broadcast %cst_110 : f32 to vector<8x128xf32>
    %289 = arith.divf %288, %287 : vector<8x128xf32>
    %290 = arith.mulf %279, %251 : vector<8x128xf32>
    %291 = arith.mulf %271, %281 : vector<8x128xf32>
    %292 = arith.addf %290, %291 : vector<8x128xf32>
    %293 = math.tanh %292 : vector<8x128xf32>
    %294 = arith.mulf %289, %293 : vector<8x128xf32>
    %295 = arith.index_cast %c6_i32 : i32 to index
    %c0_111 = arith.constant 0 : index
    %c0_112 = arith.constant 0 : index
    %296 = vector.load %arg13[%295, %c0_111, %c0_112] : memref<8x8x128xf32, #tpu.memory_space<vmem>>, vector<1x8x128xf32>
    %297 = vector.shape_cast %296 : vector<1x8x128xf32> to vector<8x128xf32>
    %298 = vector.shape_cast %294 : vector<8x128xf32> to vector<1x8x128xf32>
    tpu.vector_store %arg13[%295, %c0_111, %c0_112], %298 {strides = array<i32>} : memref<8x8x128xf32, #tpu.memory_space<vmem>>, vector<1x8x128xf32>,
    %c7_i32 = arith.constant 7 : i32
    %299 = arith.index_cast %c7_i32 : i32 to index
    %c0_113 = arith.constant 0 : index
    %c0_114 = arith.constant 0 : index
    %300 = vector.load %arg12[%299, %c0_113, %c0_114] : memref<8x8x512xf32, #tpu.memory_space<vmem>>, vector<1x8x512xf32>
    %301 = vector.shape_cast %300 : vector<1x8x512xf32> to vector<8x512xf32>
    %302 = arith.truncf %294 : vector<8x128xf32> to vector<8x128xbf16>
    %cst_115 = arith.constant dense<0.000000e+00> : vector<8x512xf32>
    %303 = tpu.matmul %302, %9, %cst_115 {dimension_numbers = #tpu.dot_dimension_numbers<[1], [0], [0], [1], [0, 0, 1, 1], [], []>} : vector<8x128xbf16>, vector<128x512xbf16>, vector<8x512xf32> -> vector<8x512xf32>
    %304 = arith.addf %301, %303 : vector<8x512xf32>
    %305 = vector.extract_strided_slice %304 {offsets = [0, 0], sizes = [8, 128], strides = [1, 1]} : vector<8x512xf32> to vector<8x128xf32>
    %cst_116 = arith.constant 0.000000e+00 : f32
    %306 = vector.broadcast %cst_116 : f32 to vector<8x128xf32>
    %307 = arith.subf %306, %305 : vector<8x128xf32>
    %308 = math.exp %307 : vector<8x128xf32>
    %cst_117 = arith.constant 1.000000e+00 : f32
    %309 = vector.broadcast %cst_117 : f32 to vector<8x128xf32>
    %310 = arith.addf %309, %308 : vector<8x128xf32>
    %cst_118 = arith.constant 1.000000e+00 : f32
    %311 = vector.broadcast %cst_118 : f32 to vector<8x128xf32>
    %312 = arith.divf %311, %310 : vector<8x128xf32>
    %313 = vector.extract_strided_slice %304 {offsets = [0, 128], sizes = [8, 128], strides = [1, 1]} : vector<8x512xf32> to vector<8x128xf32>
    %cst_119 = arith.constant 0.000000e+00 : f32
    %314 = vector.broadcast %cst_119 : f32 to vector<8x128xf32>
    %315 = arith.subf %314, %313 : vector<8x128xf32>
    %316 = math.exp %315 : vector<8x128xf32>
    %cst_120 = arith.constant 1.000000e+00 : f32
    %317 = vector.broadcast %cst_120 : f32 to vector<8x128xf32>
    %318 = arith.addf %317, %316 : vector<8x128xf32>
    %cst_121 = arith.constant 1.000000e+00 : f32
    %319 = vector.broadcast %cst_121 : f32 to vector<8x128xf32>
    %320 = arith.divf %319, %318 : vector<8x128xf32>
    %321 = vector.extract_strided_slice %304 {offsets = [0, 256], sizes = [8, 128], strides = [1, 1]} : vector<8x512xf32> to vector<8x128xf32>
    %322 = math.tanh %321 : vector<8x128xf32>
    %323 = vector.extract_strided_slice %304 {offsets = [0, 384], sizes = [8, 128], strides = [1, 1]} : vector<8x512xf32> to vector<8x128xf32>
    %cst_122 = arith.constant 0.000000e+00 : f32
    %324 = vector.broadcast %cst_122 : f32 to vector<8x128xf32>
    %325 = arith.subf %324, %323 : vector<8x128xf32>
    %326 = math.exp %325 : vector<8x128xf32>
    %cst_123 = arith.constant 1.000000e+00 : f32
    %327 = vector.broadcast %cst_123 : f32 to vector<8x128xf32>
    %328 = arith.addf %327, %326 : vector<8x128xf32>
    %cst_124 = arith.constant 1.000000e+00 : f32
    %329 = vector.broadcast %cst_124 : f32 to vector<8x128xf32>
    %330 = arith.divf %329, %328 : vector<8x128xf32>
    %331 = arith.mulf %320, %292 : vector<8x128xf32>
    %332 = arith.mulf %312, %322 : vector<8x128xf32>
    %333 = arith.addf %331, %332 : vector<8x128xf32>
    %334 = math.tanh %333 : vector<8x128xf32>
    %335 = arith.mulf %330, %334 : vector<8x128xf32>
    %336 = arith.index_cast %c7_i32 : i32 to index
    %c0_125 = arith.constant 0 : index
    %c0_126 = arith.constant 0 : index
    %337 = vector.load %arg13[%336, %c0_125, %c0_126] : memref<8x8x128xf32, #tpu.memory_space<vmem>>, vector<1x8x128xf32>
    %338 = vector.shape_cast %337 : vector<1x8x128xf32> to vector<8x128xf32>
    %339 = vector.shape_cast %335 : vector<8x128xf32> to vector<1x8x128xf32>
    tpu.vector_store %arg13[%336, %c0_125, %c0_126], %339 {strides = array<i32>} : memref<8x8x128xf32, #tpu.memory_space<vmem>>, vector<1x8x128xf32>,
    %c8_i32 = arith.constant 8 : i32
    %c0_127 = arith.constant 0 : index
    %c0_128 = arith.constant 0 : index
    %340 = vector.load %arg10[%c0_127, %c0_128] : memref<8x128xf32, #tpu.memory_space<vmem>>, vector<8x128xf32>
    tpu.vector_store %arg10[%c0_127, %c0_128], %335 {strides = array<i32>} : memref<8x128xf32, #tpu.memory_space<vmem>>, vector<8x128xf32>,
    %c0_129 = arith.constant 0 : index
    %c0_130 = arith.constant 0 : index
    %341 = vector.load %arg11[%c0_129, %c0_130] : memref<8x128xf32, #tpu.memory_space<vmem>>, vector<8x128xf32>
    tpu.vector_store %arg11[%c0_129, %c0_130], %333 {strides = array<i32>} : memref<8x128xf32, #tpu.memory_space<vmem>>, vector<8x128xf32>,
    %c0_131 = arith.constant 0 : index
    %c0_132 = arith.constant 0 : index
    %c0_133 = arith.constant 0 : index
    %342 = vector.load %arg13[%c0_131, %c0_132, %c0_133] : memref<8x8x128xf32, #tpu.memory_space<vmem>>, vector<8x8x128xf32>
    %343 = vector.shape_cast %342 : vector<8x8x128xf32> to vector<64x128xf32>
    %344 = arith.truncf %343 : vector<64x128xf32> to vector<64x128xbf16>
    %c0_134 = arith.constant 0 : index
    %c0_135 = arith.constant 0 : index
    %345 = vector.load %arg7[%c0_134, %c0_135] : memref<128x128xbf16, #tpu.memory_space<vmem>>, vector<128x128xbf16>
    %cst_136 = arith.constant dense<0.000000e+00> : vector<64x128xf32>
    %346 = tpu.matmul %344, %345, %cst_136 {dimension_numbers = #tpu.dot_dimension_numbers<[1], [0], [0], [1], [0, 0, 1, 1], [], []>} : vector<64x128xbf16>, vector<128x128xbf16>, vector<64x128xf32> -> vector<64x128xf32>
    %c0_137 = arith.constant 0 : index
    %c0_138 = arith.constant 0 : index
    %347 = vector.load %arg8[%c0_137, %c0_138] : memref<1x128xf32, #tpu.memory_space<vmem>>, vector<1x128xf32>
    %348 = vector.broadcast %347 : vector<1x128xf32> to vector<64x128xf32>
    %349 = arith.addf %346, %348 : vector<64x128xf32>
    %350 = vector.shape_cast %349 : vector<64x128xf32> to vector<8x8x128xf32>
    %c0_139 = arith.constant 0 : index
    %c0_140 = arith.constant 0 : index
    %c0_141 = arith.constant 0 : index
    %351 = vector.load %arg9[%c0_139, %c0_140, %c0_141] : memref<8x8x128xf32, #tpu.memory_space<vmem>>, vector<8x8x128xf32>
    tpu.vector_store %arg9[%c0_139, %c0_140, %c0_141], %350 {strides = array<i32>} : memref<8x8x128xf32, #tpu.memory_space<vmem>>, vector<8x8x128xf32>,
    return
  }
  func.func @transform_0(%arg0: i32) -> (i32, i32, i32) {
    %c0_i32 = arith.constant 0 : i32
    %c0_i32_0 = arith.constant 0 : i32
    %c0_i32_1 = arith.constant 0 : i32
    return %c0_i32, %arg0, %c0_i32_0 : i32, i32, i32
  }
  func.func @transform_1(%arg0: i32) -> (i32, i32) {
    %c0_i32 = arith.constant 0 : i32
    %c0_i32_0 = arith.constant 0 : i32
    return %arg0, %c0_i32 : i32, i32
  }
  func.func @transform_2(%arg0: i32) -> (i32, i32) {
    %c0_i32 = arith.constant 0 : i32
    %c0_i32_0 = arith.constant 0 : i32
    return %arg0, %c0_i32 : i32, i32
  }
  func.func @transform_3(%arg0: i32) -> (i32, i32) {
    %c0_i32 = arith.constant 0 : i32
    %c0_i32_0 = arith.constant 0 : i32
    %c0_i32_1 = arith.constant 0 : i32
    return %c0_i32, %c0_i32_0 : i32, i32
  }
  func.func @transform_4(%arg0: i32) -> (i32, i32) {
    %c0_i32 = arith.constant 0 : i32
    %c0_i32_0 = arith.constant 0 : i32
    %c0_i32_1 = arith.constant 0 : i32
    return %c0_i32, %c0_i32_0 : i32, i32
  }
  func.func @transform_5(%arg0: i32) -> (i32, i32) {
    %c0_i32 = arith.constant 0 : i32
    %c0_i32_0 = arith.constant 0 : i32
    %c0_i32_1 = arith.constant 0 : i32
    return %c0_i32, %c0_i32_0 : i32, i32
  }
  func.func @transform_6(%arg0: i32) -> (i32, i32) {
    %c0_i32 = arith.constant 0 : i32
    %c0_i32_0 = arith.constant 0 : i32
    %c0_i32_1 = arith.constant 0 : i32
    return %c0_i32, %c0_i32_0 : i32, i32
  }
  func.func @transform_7(%arg0: i32) -> (i32, i32) {
    %c0_i32 = arith.constant 0 : i32
    %c0_i32_0 = arith.constant 0 : i32
    %c0_i32_1 = arith.constant 0 : i32
    return %c0_i32, %c0_i32_0 : i32, i32
  }
  func.func @transform_8(%arg0: i32) -> (i32, i32, i32) {
    %c0_i32 = arith.constant 0 : i32
    %c0_i32_0 = arith.constant 0 : i32
    %c0_i32_1 = arith.constant 0 : i32
    return %c0_i32, %arg0, %c0_i32_0 : i32, i32, i32
  }
  func.func @transform_9(%arg0: i32) -> (i32, i32) {
    %c0_i32 = arith.constant 0 : i32
    %c0_i32_0 = arith.constant 0 : i32
    return %arg0, %c0_i32 : i32, i32
  }
  func.func @transform_10(%arg0: i32) -> (i32, i32) {
    %c0_i32 = arith.constant 0 : i32
    %c0_i32_0 = arith.constant 0 : i32
    return %arg0, %c0_i32 : i32, i32
  }
}

</mosaic_0001>

<llo_original>
// kernel: tpu_custom_call.1
$region0: #{tpu_custom_call.1}
  #allocation0 [shape = 'u32[]', space=smem, size = 0x4, offset = 0x4, fixed_abs, tag = 'smem constant byte address 0x4 - core index']
  #allocation1 [shape = 'u32[144,128]{1,0:T(1,128)}', space=vmem, size = 0x12000, scoped, tag = 'internal scratch']
  #allocation2 [shape = 'f32[8,8,512]{2,1,0:T(8,128)}', space=vmem, size = 0x20000, scoped, tag = 'scratch operand']
  #allocation3 [shape = 'f32[8,8,128]{2,1,0:T(8,128)}', space=vmem, size = 0x8000, scoped, tag = 'scratch operand']
  %s0 = inlined_call_operand.hbm [shape: bf16[8,8,128], index: 0, kind: input, shape index: {}]
  %s1 = inlined_call_operand.hbm [shape: f32[8,128], index: 1, kind: input, shape index: {}]
  %s2 = inlined_call_operand.hbm [shape: f32[8,128], index: 2, kind: input, shape index: {}]
  %s3 = inlined_call_operand.hbm [shape: bf16[128,512], index: 3, kind: input, shape index: {}]
  %s4 = inlined_call_operand.hbm [shape: bf16[128,512], index: 4, kind: input, shape index: {}]
  %s5 = inlined_call_operand.vmem [shape: f32[1,512], index: 5, kind: input, shape index: {}]
  %s6 = inlined_call_operand.hbm [shape: bf16[128,128], index: 6, kind: input, shape index: {}]
  %s7 = inlined_call_operand.vmem [shape: f32[1,128], index: 7, kind: input, shape index: {}]
  %s8 = inlined_call_operand.hbm [shape: f32[8,8,128], index: 8, kind: output, shape index: {0}]
  %s9 = inlined_call_operand.hbm [shape: f32[8,128], index: 9, kind: output, shape index: {1}]
  %s10 = inlined_call_operand.hbm [shape: f32[8,128], index: 10, kind: output, shape index: {2}]
  %11 = xla_tuple %s8, %s9, %s10
  %s12 = sld [smem:[#allocation0]]
  $region82: #{tpu_custom_call.1} parent=0
    _
  %s14 = ssub.s32 1, %s12
  %s15 = scalar_select 0, %s14, %s12
  $region1: #{tpu_custom_call.1} parent=0
    #allocation4 [shape = 'u8[16384]{0}', space=vmem, size = 0x4000, scoped, tag = 'input window, operand 0, single buffered']
    #allocation5 [shape = 's32[1]{0}', space=sflag, size = 0x4, scoped, tag = 'scoped memory for tpu_custom_call.1']
    #allocation6 [shape = 's32[1]{0}', space=sflag, size = 0x4, scoped, tag = 'scoped memory for tpu_custom_call.1']
    #allocation7 [shape = 'u8[4096]{0}', space=vmem, size = 0x1000, scoped, tag = 'input window, operand 1, single buffered']
    #allocation8 [shape = 's32[1]{0}', space=sflag, size = 0x4, scoped, tag = 'scoped memory for tpu_custom_call.1']
    #allocation9 [shape = 'u8[4096]{0}', space=vmem, size = 0x1000, scoped, tag = 'input window, operand 2, single buffered']
    #allocation10 [shape = 'u8[131072]{0}', space=vmem, size = 0x20000, scoped, tag = 'input window, operand 3, single buffered']
    #allocation11 [shape = 's32[1]{0}', space=sflag, size = 0x4, scoped, tag = 'scoped memory for tpu_custom_call.1']
    #allocation12 [shape = 'u8[131072]{0}', space=vmem, size = 0x20000, scoped, tag = 'input window, operand 4, single buffered']
    #allocation13 [shape = 'u8[32768]{0}', space=vmem, size = 0x8000, scoped, tag = 'input window, operand 6, single buffered']
    #allocation14 [shape = 's32[1]{0}', space=sflag, size = 0x4, scoped, tag = 'scoped memory for tpu_custom_call.1']
    #allocation15 [shape = 'u8[32768]{0}', space=vmem, size = 0x8000, scoped, tag = 'output window, operand 0, single buffered']
    #allocation16 [shape = 'u8[4096]{0}', space=vmem, size = 0x1000, scoped, tag = 'output window, operand 1, single buffered']
    #allocation17 [shape = 's32[1]{0}', space=sflag, size = 0x4, scoped, tag = 'scoped memory for tpu_custom_call.1']
    #allocation18 [shape = 'u8[4096]{0}', space=vmem, size = 0x1000, scoped, tag = 'output window, operand 2, single buffered']
    %16 = vsyncpa [#allocation5], 0
    %17 = vsyncpa [#allocation8], 0
    %18 = vsyncpa [#allocation11], 0
    %19 = vsyncpa [#allocation14], 0
    %20 = vsyncpa [#allocation6], 0
    %21 = vsyncpa [#allocation17], 0
    // Predicated region
    $region2: #{tpu_custom_call.1} parent=1 // pred_check
      _
    $region3: #{tpu_custom_call.1} parent=1 // pred_check_branch
      %23 = sbr.rel (0) target = $region5
    $region4: #{tpu_custom_call.1} parent=1 // pred_region
      %s25 = ssub.s32 512, 512
      %26 = vsyncadd [#allocation5], %s25
      %s27 = sshll.u32 [#allocation4], 4
      %s28 = int_to_ptr.vmem [resolvable:$true] %s27
      %33 = dma.hbm_to_vmem [thread:$0]  %s0, 512, %s28, [#allocation5], 64, 64, 4
    $region5: #{tpu_custom_call.1} parent=1 // pred_fallthru
      _
    // Predicated region
    $region6: #{tpu_custom_call.1} parent=1 // pred_check
      _
    $region7: #{tpu_custom_call.1} parent=1 // pred_check_branch
      %35 = sbr.rel (0) target = $region9
    $region8: #{tpu_custom_call.1} parent=1 // pred_region
      %s37 = ssub.s32 128, 128
      %38 = vsyncadd [#allocation8], %s37
      %s40 = sshll.u32 [#allocation7], 4
      %s41 = int_to_ptr.vmem [resolvable:$true] %s40
      %43 = dma.hbm_to_vmem [thread:$0]  %s1, 128, %s41, [#allocation8]
    $region9: #{tpu_custom_call.1} parent=1 // pred_fallthru
      _
    // Predicated region
    $region10: #{tpu_custom_call.1} parent=1 // pred_check
      _
    $region11: #{tpu_custom_call.1} parent=1 // pred_check_branch
      %45 = sbr.rel (0) target = $region13
    $region12: #{tpu_custom_call.1} parent=1 // pred_region
      %s47 = ssub.s32 128, 128
      %48 = vsyncadd [#allocation8], %s47
      %s50 = sshll.u32 [#allocation9], 4
      %s51 = int_to_ptr.vmem [resolvable:$true] %s50
      %53 = dma.hbm_to_vmem [thread:$0]  %s2, 128, %s51, [#allocation8]
    $region13: #{tpu_custom_call.1} parent=1 // pred_fallthru
      _
    // Predicated region
    $region14: #{tpu_custom_call.1} parent=1 // pred_check
      _
    $region15: #{tpu_custom_call.1} parent=1 // pred_check_branch
      %55 = sbr.rel (0) target = $region17
    $region16: #{tpu_custom_call.1} parent=1 // pred_region
      %s57 = ssub.s32 4096, 4096
      %58 = vsyncadd [#allocation11], %s57
      %s59 = sshll.u32 [#allocation10], 4
      %s60 = int_to_ptr.vmem [resolvable:$true] %s59
      %65 = dma.hbm_to_vmem [thread:$0]  %s3, 4096, %s60, [#allocation11], 256, 256, 16
    $region17: #{tpu_custom_call.1} parent=1 // pred_fallthru
      _
    // Predicated region
    $region18: #{tpu_custom_call.1} parent=1 // pred_check
      _
    $region19: #{tpu_custom_call.1} parent=1 // pred_check_branch
      %67 = sbr.rel (0) target = $region21
    $region20: #{tpu_custom_call.1} parent=1 // pred_region
      %s69 = ssub.s32 4096, 4096
      %70 = vsyncadd [#allocation11], %s69
      %s71 = sshll.u32 [#allocation12], 4
      %s72 = int_to_ptr.vmem [resolvable:$true] %s71
      %77 = dma.hbm_to_vmem [thread:$0]  %s4, 4096, %s72, [#allocation11], 256, 256, 16
    $region21: #{tpu_custom_call.1} parent=1 // pred_fallthru
      _
    // Predicated region
    $region22: #{tpu_custom_call.1} parent=1 // pred_check
      _
    $region23: #{tpu_custom_call.1} parent=1 // pred_check_branch
      %79 = sbr.rel (0) target = $region25
    $region24: #{tpu_custom_call.1} parent=1 // pred_region
      _
    $region25: #{tpu_custom_call.1} parent=1 // pred_fallthru
      _
    // Predicated region
    $region26: #{tpu_custom_call.1} parent=1 // pred_check
      _
    $region27: #{tpu_custom_call.1} parent=1 // pred_check_branch
      %81 = sbr.rel (0) target = $region29
    $region28: #{tpu_custom_call.1} parent=1 // pred_region
      %s83 = ssub.s32 1024, 1024
      %84 = vsyncadd [#allocation14], %s83
      %s85 = sshll.u32 [#allocation13], 4
      %s86 = int_to_ptr.vmem [resolvable:$true] %s85
      %91 = dma.hbm_to_vmem [thread:$0]  %s6, 1024, %s86, [#allocation14], 64, 64, 4
    $region29: #{tpu_custom_call.1} parent=1 // pred_fallthru
      _
    // Predicated region
    $region30: #{tpu_custom_call.1} parent=1 // pred_check
      _
    $region31: #{tpu_custom_call.1} parent=1 // pred_check_branch
      %93 = sbr.rel (0) target = $region33
    $region32: #{tpu_custom_call.1} parent=1 // pred_region
      _
    $region33: #{tpu_custom_call.1} parent=1 // pred_fallthru
      _
    // Predicated region
    $region34: #{tpu_custom_call.1} parent=1 // pred_check
      _
    $region35: #{tpu_custom_call.1} parent=1 // pred_check_branch
      %95 = sbr.rel (0) target = $region37
    $region36: #{tpu_custom_call.1} parent=1 // pred_region
      %96 = dma.done [#allocation5], 512
    $region37: #{tpu_custom_call.1} parent=1 // pred_fallthru
      _
    // Predicated region
    $region38: #{tpu_custom_call.1} parent=1 // pred_check
      _
    $region39: #{tpu_custom_call.1} parent=1 // pred_check_branch
      %98 = sbr.rel (0) target = $region41
    $region40: #{tpu_custom_call.1} parent=1 // pred_region
      %99 = dma.done [#allocation8], 128
    $region41: #{tpu_custom_call.1} parent=1 // pred_fallthru
      _
    // Predicated region
    $region42: #{tpu_custom_call.1} parent=1 // pred_check
      _
    $region43: #{tpu_custom_call.1} parent=1 // pred_check_branch
      %101 = sbr.rel (0) target = $region45
    $region44: #{tpu_custom_call.1} parent=1 // pred_region
      %102 = dma.done [#allocation8], 128
    $region45: #{tpu_custom_call.1} parent=1 // pred_fallthru
      _
    // Predicated region
    $region46: #{tpu_custom_call.1} parent=1 // pred_check
      _
    $region47: #{tpu_custom_call.1} parent=1 // pred_check_branch
      %104 = sbr.rel (0) target = $region49
    $region48: #{tpu_custom_call.1} parent=1 // pred_region
      %105 = dma.done [#allocation11], 4096
    $region49: #{tpu_custom_call.1} parent=1 // pred_fallthru
      _
    // Predicated region
    $region50: #{tpu_custom_call.1} parent=1 // pred_check
      _
    $region51: #{tpu_custom_call.1} parent=1 // pred_check_branch
      %107 = sbr.rel (0) target = $region53
    $region52: #{tpu_custom_call.1} parent=1 // pred_region
      %108 = dma.done [#allocation11], 4096
    $region53: #{tpu_custom_call.1} parent=1 // pred_fallthru
      _
    // Predicated region
    $region54: #{tpu_custom_call.1} parent=1 // pred_check
      _
    $region55: #{tpu_custom_call.1} parent=1 // pred_check_branch
      %110 = sbr.rel (0) target = $region57
    $region56: #{tpu_custom_call.1} parent=1 // pred_region
      %111 = dma.done [#allocation14], 1024
    $region57: #{tpu_custom_call.1} parent=1 // pred_fallthru
      _
    %v113 = vld [vmem:[#allocation4] sm:$0xf]
    %v114 = vld [vmem:[#allocation4 + $0x4] sm:$0xf]
    %v115 = vld [vmem:[#allocation4 + $0x8] sm:$0xf]
    %v116 = vld [vmem:[#allocation4 + $0xc] sm:$0xf]
    %v117 = vld [vmem:[#allocation4 + $0x10] sm:$0xf]
    %v118 = vld [vmem:[#allocation4 + $0x14] sm:$0xf]
    %v119 = vld [vmem:[#allocation4 + $0x18] sm:$0xf]
    %v120 = vld [vmem:[#allocation4 + $0x1c] sm:$0xf]
    %v121 = vld [vmem:[#allocation10] sm:$0xff]
    %v122 = vld [vmem:[#allocation10 + $0x8] sm:$0xff]
    %v123 = vld [vmem:[#allocation10 + $0x10] sm:$0xff]
    %v124 = vld [vmem:[#allocation10 + $0x18] sm:$0xff]
    %v125 = vld [vmem:[#allocation10 + $0x20] sm:$0xff]
    %v126 = vld [vmem:[#allocation10 + $0x28] sm:$0xff]
    %v127 = vld [vmem:[#allocation10 + $0x30] sm:$0xff]
    %v128 = vld [vmem:[#allocation10 + $0x38] sm:$0xff]
    %v129 = vld [vmem:[#allocation10 + $0x40] sm:$0xff]
    %v130 = vld [vmem:[#allocation10 + $0x48] sm:$0xff]
    %v131 = vld [vmem:[#allocation10 + $0x50] sm:$0xff]
    %v132 = vld [vmem:[#allocation10 + $0x58] sm:$0xff]
    %v133 = vld [vmem:[#allocation10 + $0x60] sm:$0xff]
    %v134 = vld [vmem:[#allocation10 + $0x68] sm:$0xff]
    %v135 = vld [vmem:[#allocation10 + $0x70] sm:$0xff]
    %v136 = vld [vmem:[#allocation10 + $0x78] sm:$0xff]
    %v137 = vld [vmem:[#allocation10 + $0x80] sm:$0xff]
    %v138 = vld [vmem:[#allocation10 + $0x88] sm:$0xff]
    %v139 = vld [vmem:[#allocation10 + $0x90] sm:$0xff]
    %v140 = vld [vmem:[#allocation10 + $0x98] sm:$0xff]
    %v141 = vld [vmem:[#allocation10 + $0xa0] sm:$0xff]
    %v142 = vld [vmem:[#allocation10 + $0xa8] sm:$0xff]
    %v143 = vld [vmem:[#allocation10 + $0xb0] sm:$0xff]
    %v144 = vld [vmem:[#allocation10 + $0xb8] sm:$0xff]
    %v145 = vld [vmem:[#allocation10 + $0xc0] sm:$0xff]
    %v146 = vld [vmem:[#allocation10 + $0xc8] sm:$0xff]
    %v147 = vld [vmem:[#allocation10 + $0xd0] sm:$0xff]
    %v148 = vld [vmem:[#allocation10 + $0xd8] sm:$0xff]
    %v149 = vld [vmem:[#allocation10 + $0xe0] sm:$0xff]
    %v150 = vld [vmem:[#allocation10 + $0xe8] sm:$0xff]
    %v151 = vld [vmem:[#allocation10 + $0xf0] sm:$0xff]
    %v152 = vld [vmem:[#allocation10 + $0xf8] sm:$0xff]
    %v153 = vld [vmem:[%s5] sm:$0xf]
    %v155 = vlaneseq
    %v156 = vshrl.u32 %v155, 7
    %v157 = vsub.s32 0, %v156
    %v158 = vrot.slane %v153, %v157
    %v159 = vlaneseq
    %v160 = vshrl.u32 %v159, 7
    %v161 = vsub.s32 1, %v160
    %v162 = vrot.slane %v153, %v161
    %v163 = vlaneseq
    %v164 = vshrl.u32 %v163, 7
    %v165 = vsub.s32 2, %v164
    %v166 = vrot.slane %v153, %v165
    %v167 = vlaneseq
    %v168 = vshrl.u32 %v167, 7
    %v169 = vsub.s32 3, %v168
    %v170 = vrot.slane %v153, %v169
    %v183 = vunpack.c.l.b16 %v113
    %v184 = vunpack.c.l.b16 %v114
    %v185 = vunpack.c.l.b16 %v115
    %v186 = vunpack.c.l.b16 %v116
    %v187 = vunpack.c.l.b16 %v117
    %v188 = vunpack.c.l.b16 %v118
    %v189 = vunpack.c.l.b16 %v119
    %v190 = vunpack.c.l.b16 %v120
    %v191 = vpack.c.b16 %v184, %v183
    %v192 = vpack.c.b16 %v186, %v185
    %v193 = vpack.c.b16 %v188, %v187
    %v194 = vpack.c.b16 %v190, %v189
    %v231 = vunpack.c.l.b16 %v121
    %v232 = vunpack.c.h.b16 %v121
    %v233 = vunpack.c.l.b16 %v122
    %v234 = vunpack.c.h.b16 %v122
    %v235 = vunpack.c.l.b16 %v123
    %v236 = vunpack.c.h.b16 %v123
    %v237 = vunpack.c.l.b16 %v124
    %v238 = vunpack.c.h.b16 %v124
    %v239 = vunpack.c.l.b16 %v125
    %v240 = vunpack.c.h.b16 %v125
    %v241 = vunpack.c.l.b16 %v126
    %v242 = vunpack.c.h.b16 %v126
    %v243 = vunpack.c.l.b16 %v127
    %v244 = vunpack.c.h.b16 %v127
    %v245 = vunpack.c.l.b16 %v128
    %v246 = vunpack.c.h.b16 %v128
    %v247 = vunpack.c.l.b16 %v129
    %v248 = vunpack.c.h.b16 %v129
    %v249 = vunpack.c.l.b16 %v130
    %v250 = vunpack.c.h.b16 %v130
    %v251 = vunpack.c.l.b16 %v131
    %v252 = vunpack.c.h.b16 %v131
    %v253 = vunpack.c.l.b16 %v132
    %v254 = vunpack.c.h.b16 %v132
    %v255 = vunpack.c.l.b16 %v133
    %v256 = vunpack.c.h.b16 %v133
    %v257 = vunpack.c.l.b16 %v134
    %v258 = vunpack.c.h.b16 %v134
    %v259 = vunpack.c.l.b16 %v135
    %v260 = vunpack.c.h.b16 %v135
    %v261 = vunpack.c.l.b16 %v136
    %v262 = vunpack.c.h.b16 %v136
    %v263 = vunpack.c.l.b16 %v137
    %v264 = vunpack.c.h.b16 %v137
    %v265 = vunpack.c.l.b16 %v138
    %v266 = vunpack.c.h.b16 %v138
    %v267 = vunpack.c.l.b16 %v139
    %v268 = vunpack.c.h.b16 %v139
    %v269 = vunpack.c.l.b16 %v140
    %v270 = vunpack.c.h.b16 %v140
    %v271 = vunpack.c.l.b16 %v141
    %v272 = vunpack.c.h.b16 %v141
    %v273 = vunpack.c.l.b16 %v142
    %v274 = vunpack.c.h.b16 %v142
    %v275 = vunpack.c.l.b16 %v143
    %v276 = vunpack.c.h.b16 %v143
    %v277 = vunpack.c.l.b16 %v144
    %v278 = vunpack.c.h.b16 %v144
    %v279 = vunpack.c.l.b16 %v145
    %v280 = vunpack.c.h.b16 %v145
    %v281 = vunpack.c.l.b16 %v146
    %v282 = vunpack.c.h.b16 %v146
    %v283 = vunpack.c.l.b16 %v147
    %v284 = vunpack.c.h.b16 %v147
    %v285 = vunpack.c.l.b16 %v148
    %v286 = vunpack.c.h.b16 %v148
    %v287 = vunpack.c.l.b16 %v149
    %v288 = vunpack.c.h.b16 %v149
    %v289 = vunpack.c.l.b16 %v150
    %v290 = vunpack.c.h.b16 %v150
    %v291 = vunpack.c.l.b16 %v151
    %v292 = vunpack.c.h.b16 %v151
    %v293 = vunpack.c.l.b16 %v152
    %v294 = vunpack.c.h.b16 %v152
    %v295 = vpack.c.b16 %v235, %v231
    %v296 = vpack.c.b16 %v236, %v232
    %v297 = vpack.c.b16 %v237, %v233
    %v298 = vpack.c.b16 %v238, %v234
    %v299 = vpack.c.b16 %v243, %v239
    %v300 = vpack.c.b16 %v244, %v240
    %v301 = vpack.c.b16 %v245, %v241
    %v302 = vpack.c.b16 %v246, %v242
    %v303 = vpack.c.b16 %v251, %v247
    %v304 = vpack.c.b16 %v252, %v248
    %v305 = vpack.c.b16 %v253, %v249
    %v306 = vpack.c.b16 %v254, %v250
    %v307 = vpack.c.b16 %v259, %v255
    %v308 = vpack.c.b16 %v260, %v256
    %v309 = vpack.c.b16 %v261, %v257
    %v310 = vpack.c.b16 %v262, %v258
    %v311 = vpack.c.b16 %v267, %v263
    %v312 = vpack.c.b16 %v268, %v264
    %v313 = vpack.c.b16 %v269, %v265
    %v314 = vpack.c.b16 %v270, %v266
    %v315 = vpack.c.b16 %v275, %v271
    %v316 = vpack.c.b16 %v276, %v272
    %v317 = vpack.c.b16 %v277, %v273
    %v318 = vpack.c.b16 %v278, %v274
    %v319 = vpack.c.b16 %v283, %v279
    %v320 = vpack.c.b16 %v284, %v280
    %v321 = vpack.c.b16 %v285, %v281
    %v322 = vpack.c.b16 %v286, %v282
    %v323 = vpack.c.b16 %v291, %v287
    %v324 = vpack.c.b16 %v292, %v288
    %v325 = vpack.c.b16 %v293, %v289
    %v326 = vpack.c.b16 %v294, %v290
    %359 = vmatprep.subr.bf16.mxu0 %v296
    %360 = vmatpush1.bf16.msra.mxu0 %v295
    %361 = vmatprep.subr.bf16.mxu0 %v300
    %362 = vmatpush1.bf16.msra.mxu0 %v299
    %363 = vmatprep.subr.bf16.mxu0 %v304
    %364 = vmatpush1.bf16.msra.mxu0 %v303
    %365 = vmatprep.subr.bf16.mxu0 %v308
    %366 = vmatpush1.bf16.msra.mxu0 %v307
    %367 = vmatprep.subr.bf16.mxu0 %v312
    %368 = vmatpush1.bf16.msra.mxu0 %v311
    %369 = vmatprep.subr.bf16.mxu0 %v316
    %370 = vmatpush1.bf16.msra.mxu0 %v315
    %371 = vmatprep.subr.bf16.mxu0 %v320
    %372 = vmatpush1.bf16.msra.mxu0 %v319
    %373 = vmatprep.subr.bf16.mxu0 %v324
    %374 = vmatpush1.bf16.msra.mxu0 %v323
    %375 = vmatprep.subr.bf16.mxu0 0
    %376 = vmatpush1.bf16.msra.mxu0 0
    %377 = vmatprep.subr.bf16.mxu0 0
    %378 = vmatpush1.bf16.msra.mxu0 0
    %379 = vmatprep.subr.bf16.mxu0 0
    %380 = vmatpush1.bf16.msra.mxu0 0
    %381 = vmatprep.subr.bf16.mxu0 0
    %382 = vmatpush1.bf16.msra.mxu0 0
    %383 = vmatprep.subr.bf16.mxu0 0
    %384 = vmatpush1.bf16.msra.mxu0 0
    %385 = vmatprep.subr.bf16.mxu0 0
    %386 = vmatpush1.bf16.msra.mxu0 0
    %387 = vmatprep.subr.bf16.mxu0 0
    %388 = vmatpush1.bf16.msra.mxu0 0
    %389 = vmatprep.subr.bf16.mxu0 0
    %390 = vmatpush1.bf16.msra.mxu0 0
    %391 = vmatprep.mubr.bf16.mxu0 0
    %392 = vmatmul.mubr.bf16.gmra.mrb[0].mxu0 %v191
    %v393 = vpop.f32.mrb[0].mxu0
    %v394 = vadd.f32 %v158, %v393
    %v395 = vpop.f32.mrb[0].mxu0
    %v396 = vadd.f32 %v162, %v395
    %v397 = vpop.f32.mrb[0].mxu0
    %v398 = vadd.f32 %v158, %v397
    %v399 = vpop.f32.mrb[0].mxu0
    %v400 = vadd.f32 %v162, %v399
    %401 = vmatprep.mubr.bf16.mxu0 0
    %402 = vmatmul.mubr.bf16.gmra.mrb[0].mxu0 %v192
    %v403 = vpop.f32.mrb[0].mxu0
    %v404 = vadd.f32 %v158, %v403
    %v405 = vpop.f32.mrb[0].mxu0
    %v406 = vadd.f32 %v162, %v405
    %v407 = vpop.f32.mrb[0].mxu0
    %v408 = vadd.f32 %v158, %v407
    %v409 = vpop.f32.mrb[0].mxu0
    %v410 = vadd.f32 %v162, %v409
    %411 = vmatprep.mubr.bf16.mxu0 0
    %412 = vmatmul.mubr.bf16.gmra.mrb[0].mxu0 %v193
    %v413 = vpop.f32.mrb[0].mxu0
    %v414 = vadd.f32 %v158, %v413
    %v415 = vpop.f32.mrb[0].mxu0
    %v416 = vadd.f32 %v162, %v415
    %v417 = vpop.f32.mrb[0].mxu0
    %v418 = vadd.f32 %v158, %v417
    %v419 = vpop.f32.mrb[0].mxu0
    %v420 = vadd.f32 %v162, %v419
    %421 = vmatprep.mubr.bf16.mxu0 0
    %422 = vmatmul.mubr.bf16.gmra.mrb[0].mxu0 %v194
    %v423 = vpop.f32.mrb[0].mxu0
    %v424 = vadd.f32 %v158, %v423
    %v425 = vpop.f32.mrb[0].mxu0
    %v426 = vadd.f32 %v162, %v425
    %v427 = vpop.f32.mrb[0].mxu0
    %v428 = vadd.f32 %v158, %v427
    %v429 = vpop.f32.mrb[0].mxu0
    %v430 = vadd.f32 %v162, %v429
    %431 = vdwg.mxu0
    %432 = vmatprep.subr.bf16.mxu0 %v298
    %433 = vmatpush1.bf16.msra.mxu0 %v297
    %434 = vmatprep.subr.bf16.mxu0 %v302
    %435 = vmatpush1.bf16.msra.mxu0 %v301
    %436 = vmatprep.subr.bf16.mxu0 %v306
    %437 = vmatpush1.bf16.msra.mxu0 %v305
    %438 = vmatprep.subr.bf16.mxu0 %v310
    %439 = vmatpush1.bf16.msra.mxu0 %v309
    %440 = vmatprep.subr.bf16.mxu0 %v314
    %441 = vmatpush1.bf16.msra.mxu0 %v313
    %442 = vmatprep.subr.bf16.mxu0 %v318
    %443 = vmatpush1.bf16.msra.mxu0 %v317
    %444 = vmatprep.subr.bf16.mxu0 %v322
    %445 = vmatpush1.bf16.msra.mxu0 %v321
    %446 = vmatprep.subr.bf16.mxu0 %v326
    %447 = vmatpush1.bf16.msra.mxu0 %v325
    %448 = vmatprep.subr.bf16.mxu0 0
    %449 = vmatpush1.bf16.msra.mxu0 0
    %450 = vmatprep.subr.bf16.mxu0 0
    %451 = vmatpush1.bf16.msra.mxu0 0
    %452 = vmatprep.subr.bf16.mxu0 0
    %453 = vmatpush1.bf16.msra.mxu0 0
    %454 = vmatprep.subr.bf16.mxu0 0
    %455 = vmatpush1.bf16.msra.mxu0 0
    %456 = vmatprep.subr.bf16.mxu0 0
    %457 = vmatpush1.bf16.msra.mxu0 0
    %458 = vmatprep.subr.bf16.mxu0 0
    %459 = vmatpush1.bf16.msra.mxu0 0
    %460 = vmatprep.subr.bf16.mxu0 0
    %461 = vmatpush1.bf16.msra.mxu0 0
    %462 = vmatprep.subr.bf16.mxu0 0
    %463 = vmatpush1.bf16.msra.mxu0 0
    %464 = vmatprep.mubr.bf16.mxu0 0
    %465 = vmatmul.mubr.bf16.gmra.mrb[0].mxu0 %v191
    %v466 = vpop.f32.mrb[0].mxu0
    %v467 = vadd.f32 %v166, %v466
    %v468 = vpop.f32.mrb[0].mxu0
    %v469 = vadd.f32 %v170, %v468
    %v470 = vpop.f32.mrb[0].mxu0
    %v471 = vadd.f32 %v166, %v470
    %v472 = vpop.f32.mrb[0].mxu0
    %v473 = vadd.f32 %v170, %v472
    %474 = vmatprep.mubr.bf16.mxu0 0
    %475 = vmatmul.mubr.bf16.gmra.mrb[0].mxu0 %v192
    %v476 = vpop.f32.mrb[0].mxu0
    %v477 = vadd.f32 %v166, %v476
    %v478 = vpop.f32.mrb[0].mxu0
    %v479 = vadd.f32 %v170, %v478
    %v480 = vpop.f32.mrb[0].mxu0
    %v481 = vadd.f32 %v166, %v480
    %v482 = vpop.f32.mrb[0].mxu0
    %v483 = vadd.f32 %v170, %v482
    %484 = vmatprep.mubr.bf16.mxu0 0
    %485 = vmatmul.mubr.bf16.gmra.mrb[0].mxu0 %v193
    %v486 = vpop.f32.mrb[0].mxu0
    %v487 = vadd.f32 %v166, %v486
    %v488 = vpop.f32.mrb[0].mxu0
    %v489 = vadd.f32 %v170, %v488
    %v490 = vpop.f32.mrb[0].mxu0
    %v491 = vadd.f32 %v166, %v490
    %v492 = vpop.f32.mrb[0].mxu0
    %v493 = vadd.f32 %v170, %v492
    %494 = vmatprep.mubr.bf16.mxu0 0
    %495 = vmatmul.mubr.bf16.gmra.mrb[0].mxu0 %v194
    %v496 = vpop.f32.mrb[0].mxu0
    %v497 = vadd.f32 %v166, %v496
    %v498 = vpop.f32.mrb[0].mxu0
    %v499 = vadd.f32 %v170, %v498
    %v500 = vpop.f32.mrb[0].mxu0
    %v501 = vadd.f32 %v166, %v500
    %v502 = vpop.f32.mrb[0].mxu0
    %v503 = vadd.f32 %v170, %v502
    %504 = vdwg.mxu0
    %505 = vst [vmem:[#allocation2] sm:$0xff] %v394
    %506 = vst [vmem:[#allocation2 + $0x8] sm:$0xff] %v396
    %507 = vst [vmem:[#allocation2 + $0x10] sm:$0xff] %v467
    %508 = vst [vmem:[#allocation2 + $0x18] sm:$0xff] %v469
    %509 = vst [vmem:[#allocation2 + $0x20] sm:$0xff] %v398
    %510 = vst [vmem:[#allocation2 + $0x28] sm:$0xff] %v400
    %511 = vst [vmem:[#allocation2 + $0x30] sm:$0xff] %v471
    %512 = vst [vmem:[#allocation2 + $0x38] sm:$0xff] %v473
    %513 = vst [vmem:[#allocation2 + $0x40] sm:$0xff] %v404
    %514 = vst [vmem:[#allocation2 + $0x48] sm:$0xff] %v406
    %515 = vst [vmem:[#allocation2 + $0x50] sm:$0xff] %v477
    %516 = vst [vmem:[#allocation2 + $0x58] sm:$0xff] %v479
    %517 = vst [vmem:[#allocation2 + $0x60] sm:$0xff] %v408
    %518 = vst [vmem:[#allocation2 + $0x68] sm:$0xff] %v410
    %519 = vst [vmem:[#allocation2 + $0x70] sm:$0xff] %v481
    %520 = vst [vmem:[#allocation2 + $0x78] sm:$0xff] %v483
    %521 = vst [vmem:[#allocation2 + $0x80] sm:$0xff] %v414
    %522 = vst [vmem:[#allocation2 + $0x88] sm:$0xff] %v416
    %523 = vst [vmem:[#allocation2 + $0x90] sm:$0xff] %v487
    %524 = vst [vmem:[#allocation2 + $0x98] sm:$0xff] %v489
    %525 = vst [vmem:[#allocation2 + $0xa0] sm:$0xff] %v418
    %526 = vst [vmem:[#allocation2 + $0xa8] sm:$0xff] %v420
    %527 = vst [vmem:[#allocation2 + $0xb0] sm:$0xff] %v491
    %528 = vst [vmem:[#allocation2 + $0xb8] sm:$0xff] %v493
    %529 = vst [vmem:[#allocation2 + $0xc0] sm:$0xff] %v424
    %530 = vst [vmem:[#allocation2 + $0xc8] sm:$0xff] %v426
    %531 = vst [vmem:[#allocation2 + $0xd0] sm:$0xff] %v497
    %532 = vst [vmem:[#allocation2 + $0xd8] sm:$0xff] %v499
    %533 = vst [vmem:[#allocation2 + $0xe0] sm:$0xff] %v428
    %534 = vst [vmem:[#allocation2 + $0xe8] sm:$0xff] %v430
    %535 = vst [vmem:[#allocation2 + $0xf0] sm:$0xff] %v501
    %536 = vst [vmem:[#allocation2 + $0xf8] sm:$0xff] %v503
    %v537 = vld [vmem:[#allocation12] sm:$0xff]
    %v538 = vld [vmem:[#allocation12 + $0x8] sm:$0xff]
    %v539 = vld [vmem:[#allocation12 + $0x10] sm:$0xff]
    %v540 = vld [vmem:[#allocation12 + $0x18] sm:$0xff]
    %v541 = vld [vmem:[#allocation12 + $0x20] sm:$0xff]
    %v542 = vld [vmem:[#allocation12 + $0x28] sm:$0xff]
    %v543 = vld [vmem:[#allocation12 + $0x30] sm:$0xff]
    %v544 = vld [vmem:[#allocation12 + $0x38] sm:$0xff]
    %v545 = vld [vmem:[#allocation12 + $0x40] sm:$0xff]
    %v546 = vld [vmem:[#allocation12 + $0x48] sm:$0xff]
    %v547 = vld [vmem:[#allocation12 + $0x50] sm:$0xff]
    %v548 = vld [vmem:[#allocation12 + $0x58] sm:$0xff]
    %v549 = vld [vmem:[#allocation12 + $0x60] sm:$0xff]
    %v550 = vld [vmem:[#allocation12 + $0x68] sm:$0xff]
    %v551 = vld [vmem:[#allocation12 + $0x70] sm:$0xff]
    %v552 = vld [vmem:[#allocation12 + $0x78] sm:$0xff]
    %v553 = vld [vmem:[#allocation12 + $0x80] sm:$0xff]
    %v554 = vld [vmem:[#allocation12 + $0x88] sm:$0xff]
    %v555 = vld [vmem:[#allocation12 + $0x90] sm:$0xff]
    %v556 = vld [vmem:[#allocation12 + $0x98] sm:$0xff]
    %v557 = vld [vmem:[#allocation12 + $0xa0] sm:$0xff]
    %v558 = vld [vmem:[#allocation12 + $0xa8] sm:$0xff]
    %v559 = vld [vmem:[#allocation12 + $0xb0] sm:$0xff]
    %v560 = vld [vmem:[#allocation12 + $0xb8] sm:$0xff]
    %v561 = vld [vmem:[#allocation12 + $0xc0] sm:$0xff]
    %v562 = vld [vmem:[#allocation12 + $0xc8] sm:$0xff]
    %v563 = vld [vmem:[#allocation12 + $0xd0] sm:$0xff]
    %v564 = vld [vmem:[#allocation12 + $0xd8] sm:$0xff]
    %v565 = vld [vmem:[#allocation12 + $0xe0] sm:$0xff]
    %v566 = vld [vmem:[#allocation12 + $0xe8] sm:$0xff]
    %v567 = vld [vmem:[#allocation12 + $0xf0] sm:$0xff]
    %v568 = vld [vmem:[#allocation12 + $0xf8] sm:$0xff]
    %v569 = vld [vmem:[#allocation7] sm:$0xff]
    %v570 = vld [vmem:[#allocation9] sm:$0xff]
    %v571 = vld [vmem:[#allocation2] sm:$0xff]
    %v572 = vld [vmem:[#allocation2 + $0x8] sm:$0xff]
    %v573 = vld [vmem:[#allocation2 + $0x10] sm:$0xff]
    %v574 = vld [vmem:[#allocation2 + $0x18] sm:$0xff]
    %v575 = vpack.c.bf16 %v569, %v569
    %v608 = vunpack.c.l.b16 %v537
    %v609 = vunpack.c.h.b16 %v537
    %v610 = vunpack.c.l.b16 %v538
    %v611 = vunpack.c.h.b16 %v538
    %v612 = vunpack.c.l.b16 %v539
    %v613 = vunpack.c.h.b16 %v539
    %v614 = vunpack.c.l.b16 %v540
    %v615 = vunpack.c.h.b16 %v540
    %v616 = vunpack.c.l.b16 %v541
    %v617 = vunpack.c.h.b16 %v541
    %v618 = vunpack.c.l.b16 %v542
    %v619 = vunpack.c.h.b16 %v542
    %v620 = vunpack.c.l.b16 %v543
    %v621 = vunpack.c.h.b16 %v543
    %v622 = vunpack.c.l.b16 %v544
    %v623 = vunpack.c.h.b16 %v544
    %v624 = vunpack.c.l.b16 %v545
    %v625 = vunpack.c.h.b16 %v545
    %v626 = vunpack.c.l.b16 %v546
    %v627 = vunpack.c.h.b16 %v546
    %v628 = vunpack.c.l.b16 %v547
    %v629 = vunpack.c.h.b16 %v547
    %v630 = vunpack.c.l.b16 %v548
    %v631 = vunpack.c.h.b16 %v548
    %v632 = vunpack.c.l.b16 %v549
    %v633 = vunpack.c.h.b16 %v549
    %v634 = vunpack.c.l.b16 %v550
    %v635 = vunpack.c.h.b16 %v550
    %v636 = vunpack.c.l.b16 %v551
    %v637 = vunpack.c.h.b16 %v551
    %v638 = vunpack.c.l.b16 %v552
    %v639 = vunpack.c.h.b16 %v552
    %v640 = vunpack.c.l.b16 %v553
    %v641 = vunpack.c.h.b16 %v553
    %v642 = vunpack.c.l.b16 %v554
    %v643 = vunpack.c.h.b16 %v554
    %v644 = vunpack.c.l.b16 %v555
    %v645 = vunpack.c.h.b16 %v555
    %v646 = vunpack.c.l.b16 %v556
    %v647 = vunpack.c.h.b16 %v556
    %v648 = vunpack.c.l.b16 %v557
    %v649 = vunpack.c.h.b16 %v557
    %v650 = vunpack.c.l.b16 %v558
    %v651 = vunpack.c.h.b16 %v558
    %v652 = vunpack.c.l.b16 %v559
    %v653 = vunpack.c.h.b16 %v559
    %v654 = vunpack.c.l.b16 %v560
    %v655 = vunpack.c.h.b16 %v560
    %v656 = vunpack.c.l.b16 %v561
    %v657 = vunpack.c.h.b16 %v561
    %v658 = vunpack.c.l.b16 %v562
    %v659 = vunpack.c.h.b16 %v562
    %v660 = vunpack.c.l.b16 %v563
    %v661 = vunpack.c.h.b16 %v563
    %v662 = vunpack.c.l.b16 %v564
    %v663 = vunpack.c.h.b16 %v564
    %v664 = vunpack.c.l.b16 %v565
    %v665 = vunpack.c.h.b16 %v565
    %v666 = vunpack.c.l.b16 %v566
    %v667 = vunpack.c.h.b16 %v566
    %v668 = vunpack.c.l.b16 %v567
    %v669 = vunpack.c.h.b16 %v567
    %v670 = vunpack.c.l.b16 %v568
    %v671 = vunpack.c.h.b16 %v568
    %v672 = vpack.c.b16 %v612, %v608
    %v673 = vpack.c.b16 %v613, %v609
    %v674 = vpack.c.b16 %v614, %v610
    %v675 = vpack.c.b16 %v615, %v611
    %v676 = vpack.c.b16 %v620, %v616
    %v677 = vpack.c.b16 %v621, %v617
    %v678 = vpack.c.b16 %v622, %v618
    %v679 = vpack.c.b16 %v623, %v619
    %v680 = vpack.c.b16 %v628, %v624
    %v681 = vpack.c.b16 %v629, %v625
    %v682 = vpack.c.b16 %v630, %v626
    %v683 = vpack.c.b16 %v631, %v627
    %v684 = vpack.c.b16 %v636, %v632
    %v685 = vpack.c.b16 %v637, %v633
    %v686 = vpack.c.b16 %v638, %v634
    %v687 = vpack.c.b16 %v639, %v635
    %v688 = vpack.c.b16 %v644, %v640
    %v689 = vpack.c.b16 %v645, %v641
    %v690 = vpack.c.b16 %v646, %v642
    %v691 = vpack.c.b16 %v647, %v643
    %v692 = vpack.c.b16 %v652, %v648
    %v693 = vpack.c.b16 %v653, %v649
    %v694 = vpack.c.b16 %v654, %v650
    %v695 = vpack.c.b16 %v655, %v651
    %v696 = vpack.c.b16 %v660, %v656
    %v697 = vpack.c.b16 %v661, %v657
    %v698 = vpack.c.b16 %v662, %v658
    %v699 = vpack.c.b16 %v663, %v659
    %v700 = vpack.c.b16 %v668, %v664
    %v701 = vpack.c.b16 %v669, %v665
    %v702 = vpack.c.b16 %v670, %v666
    %v703 = vpack.c.b16 %v671, %v667
    %736 = vmatprep.subr.bf16.mxu0 %v673
    %737 = vmatpush1.bf16.msra.mxu0 %v672
    %738 = vmatprep.subr.bf16.mxu0 %v677
    %739 = vmatpush1.bf16.msra.mxu0 %v676
    %740 = vmatprep.subr.bf16.mxu0 %v681
    %741 = vmatpush1.bf16.msra.mxu0 %v680
    %742 = vmatprep.subr.bf16.mxu0 %v685
    %743 = vmatpush1.bf16.msra.mxu0 %v684
    %744 = vmatprep.subr.bf16.mxu0 %v689
    %745 = vmatpush1.bf16.msra.mxu0 %v688
    %746 = vmatprep.subr.bf16.mxu0 %v693
    %747 = vmatpush1.bf16.msra.mxu0 %v692
    %748 = vmatprep.subr.bf16.mxu0 %v697
    %749 = vmatpush1.bf16.msra.mxu0 %v696
    %750 = vmatprep.subr.bf16.mxu0 %v701
    %751 = vmatpush1.bf16.msra.mxu0 %v700
    %752 = vmatprep.subr.bf16.mxu0 0
    %753 = vmatpush1.bf16.msra.mxu0 0
    %754 = vmatprep.subr.bf16.mxu0 0
    %755 = vmatpush1.bf16.msra.mxu0 0
    %756 = vmatprep.subr.bf16.mxu0 0
    %757 = vmatpush1.bf16.msra.mxu0 0
    %758 = vmatprep.subr.bf16.mxu0 0
    %759 = vmatpush1.bf16.msra.mxu0 0
    %760 = vmatprep.subr.bf16.mxu0 0
    %761 = vmatpush1.bf16.msra.mxu0 0
    %762 = vmatprep.subr.bf16.mxu0 0
    %763 = vmatpush1.bf16.msra.mxu0 0
    %764 = vmatprep.subr.bf16.mxu0 0
    %765 = vmatpush1.bf16.msra.mxu0 0
    %766 = vmatprep.subr.bf16.mxu0 0
    %767 = vmatpush1.bf16.msra.mxu0 0
    %768 = vmatprep.mubr.bf16.mxu0 0
    %769 = vmatmul.mubr.bf16.gmra.mrb[0].mxu0 %v575
    %v770 = vpop.f32.mrb[0].mxu0
    %v771 = vadd.f32 0.0, %v770
    %v772 = vpop.f32.mrb[0].mxu0
    %v773 = vadd.f32 0.0, %v772
    %v774 = vpop.f32.mrb[0].mxu0
    %v775 = vpop.f32.mrb[0].mxu0
    %776 = vdwg.mxu0
    %777 = vmatprep.subr.bf16.mxu0 %v675
    %778 = vmatpush1.bf16.msra.mxu0 %v674
    %779 = vmatprep.subr.bf16.mxu0 %v679
    %780 = vmatpush1.bf16.msra.mxu0 %v678
    %781 = vmatprep.subr.bf16.mxu0 %v683
    %782 = vmatpush1.bf16.msra.mxu0 %v682
    %783 = vmatprep.subr.bf16.mxu0 %v687
    %784 = vmatpush1.bf16.msra.mxu0 %v686
    %785 = vmatprep.subr.bf16.mxu0 %v691
    %786 = vmatpush1.bf16.msra.mxu0 %v690
    %787 = vmatprep.subr.bf16.mxu0 %v695
    %788 = vmatpush1.bf16.msra.mxu0 %v694
    %789 = vmatprep.subr.bf16.mxu0 %v699
    %790 = vmatpush1.bf16.msra.mxu0 %v698
    %791 = vmatprep.subr.bf16.mxu0 %v703
    %792 = vmatpush1.bf16.msra.mxu0 %v702
    %793 = vmatprep.subr.bf16.mxu0 0
    %794 = vmatpush1.bf16.msra.mxu0 0
    %795 = vmatprep.subr.bf16.mxu0 0
    %796 = vmatpush1.bf16.msra.mxu0 0
    %797 = vmatprep.subr.bf16.mxu0 0
    %798 = vmatpush1.bf16.msra.mxu0 0
    %799 = vmatprep.subr.bf16.mxu0 0
    %800 = vmatpush1.bf16.msra.mxu0 0
    %801 = vmatprep.subr.bf16.mxu0 0
    %802 = vmatpush1.bf16.msra.mxu0 0
    %803 = vmatprep.subr.bf16.mxu0 0
    %804 = vmatpush1.bf16.msra.mxu0 0
    %805 = vmatprep.subr.bf16.mxu0 0
    %806 = vmatpush1.bf16.msra.mxu0 0
    %807 = vmatprep.subr.bf16.mxu0 0
    %808 = vmatpush1.bf16.msra.mxu0 0
    %809 = vmatprep.mubr.bf16.mxu0 0
    %810 = vmatmul.mubr.bf16.gmra.mrb[0].mxu0 %v575
    %v811 = vpop.f32.mrb[0].mxu0
    %v812 = vadd.f32 0.0, %v811
    %v813 = vpop.f32.mrb[0].mxu0
    %v814 = vadd.f32 0.0, %v813
    %v815 = vpop.f32.mrb[0].mxu0
    %v816 = vpop.f32.mrb[0].mxu0
    %817 = vdwg.mxu0
    %v818 = vadd.f32 %v571, %v771
    %v819 = vadd.f32 %v572, %v773
    %v820 = vadd.f32 %v573, %v812
    %v821 = vadd.f32 %v574, %v814
    %v822 = vsub.f32 0.0, %v818
    %v823 = vmul.f32 %v822, 1.442695
    %v824 = vpow.pop %v823
    %v825 = vadd.f32 %v824, 1.0
    %v826 = vrcp.pop %v825
    %v827 = vmul.f32 1.0, %v826
    %v828 = vsub.f32 0.0, %v819
    %v829 = vmul.f32 %v828, 1.442695
    %v830 = vpow.pop %v829
    %v831 = vadd.f32 %v830, 1.0
    %v832 = vrcp.pop %v831
    %v833 = vmul.f32 1.0, %v832
    %v834 = vtanh.pop %v820
    %v835 = vsub.f32 0.0, %v821
    %v836 = vmul.f32 %v835, 1.442695
    %v837 = vpow.pop %v836
    %v838 = vadd.f32 %v837, 1.0
    %v839 = vrcp.pop %v838
    %v840 = vmul.f32 1.0, %v839
    %v841 = vmul.f32 %v833, %v570
    %v842 = vmul.f32 %v827, %v834
    %v843 = vadd.f32 %v841, %v842
    %v844 = vtanh.pop %v843
    %v845 = vmul.f32 %v840, %v844
    %846 = vst [vmem:[#allocation3] sm:$0xff] %v845
    %s847 = scalar_lea.vmem [#allocation2], 32
    %v848 = vld [vmem:[%s847] sm:$0xff]
    %v849 = vld [vmem:[%s847 + $0x8] sm:$0xff]
    %v850 = vld [vmem:[%s847 + $0x10] sm:$0xff]
    %v851 = vld [vmem:[%s847 + $0x18] sm:$0xff]
    %v852 = vpack.c.bf16 %v845, %v845
    %853 = vmatprep.subr.bf16.mxu0 %v673
    %854 = vmatpush1.bf16.msra.mxu0 %v672
    %855 = vmatprep.subr.bf16.mxu0 %v677
    %856 = vmatpush1.bf16.msra.mxu0 %v676
    %857 = vmatprep.subr.bf16.mxu0 %v681
    %858 = vmatpush1.bf16.msra.mxu0 %v680
    %859 = vmatprep.subr.bf16.mxu0 %v685
    %860 = vmatpush1.bf16.msra.mxu0 %v684
    %861 = vmatprep.subr.bf16.mxu0 %v689
    %862 = vmatpush1.bf16.msra.mxu0 %v688
    %863 = vmatprep.subr.bf16.mxu0 %v693
    %864 = vmatpush1.bf16.msra.mxu0 %v692
    %865 = vmatprep.subr.bf16.mxu0 %v697
    %866 = vmatpush1.bf16.msra.mxu0 %v696
    %867 = vmatprep.subr.bf16.mxu0 %v701
    %868 = vmatpush1.bf16.msra.mxu0 %v700
    %869 = vmatprep.subr.bf16.mxu0 0
    %870 = vmatpush1.bf16.msra.mxu0 0
    %871 = vmatprep.subr.bf16.mxu0 0
    %872 = vmatpush1.bf16.msra.mxu0 0
    %873 = vmatprep.subr.bf16.mxu0 0
    %874 = vmatpush1.bf16.msra.mxu0 0
    %875 = vmatprep.subr.bf16.mxu0 0
    %876 = vmatpush1.bf16.msra.mxu0 0
    %877 = vmatprep.subr.bf16.mxu0 0
    %878 = vmatpush1.bf16.msra.mxu0 0
    %879 = vmatprep.subr.bf16.mxu0 0
    %880 = vmatpush1.bf16.msra.mxu0 0
    %881 = vmatprep.subr.bf16.mxu0 0
    %882 = vmatpush1.bf16.msra.mxu0 0
    %883 = vmatprep.subr.bf16.mxu0 0
    %884 = vmatpush1.bf16.msra.mxu0 0
    %885 = vmatprep.mubr.bf16.mxu0 0
    %886 = vmatmul.mubr.bf16.gmra.mrb[0].mxu0 %v852
    %v887 = vpop.f32.mrb[0].mxu0
    %v888 = vadd.f32 0.0, %v887
    %v889 = vpop.f32.mrb[0].mxu0
    %v890 = vadd.f32 0.0, %v889
    %v891 = vpop.f32.mrb[0].mxu0
    %v892 = vpop.f32.mrb[0].mxu0
    %893 = vdwg.mxu0
    %894 = vmatprep.subr.bf16.mxu0 %v675
    %895 = vmatpush1.bf16.msra.mxu0 %v674
    %896 = vmatprep.subr.bf16.mxu0 %v679
    %897 = vmatpush1.bf16.msra.mxu0 %v678
    %898 = vmatprep.subr.bf16.mxu0 %v683
    %899 = vmatpush1.bf16.msra.mxu0 %v682
    %900 = vmatprep.subr.bf16.mxu0 %v687
    %901 = vmatpush1.bf16.msra.mxu0 %v686
    %902 = vmatprep.subr.bf16.mxu0 %v691
    %903 = vmatpush1.bf16.msra.mxu0 %v690
    %904 = vmatprep.subr.bf16.mxu0 %v695
    %905 = vmatpush1.bf16.msra.mxu0 %v694
    %906 = vmatprep.subr.bf16.mxu0 %v699
    %907 = vmatpush1.bf16.msra.mxu0 %v698
    %908 = vmatprep.subr.bf16.mxu0 %v703
    %909 = vmatpush1.bf16.msra.mxu0 %v702
    %910 = vmatprep.subr.bf16.mxu0 0
    %911 = vmatpush1.bf16.msra.mxu0 0
    %912 = vmatprep.subr.bf16.mxu0 0
    %913 = vmatpush1.bf16.msra.mxu0 0
    %914 = vmatprep.subr.bf16.mxu0 0
    %915 = vmatpush1.bf16.msra.mxu0 0
    %916 = vmatprep.subr.bf16.mxu0 0
    %917 = vmatpush1.bf16.msra.mxu0 0
    %918 = vmatprep.subr.bf16.mxu0 0
    %919 = vmatpush1.bf16.msra.mxu0 0
    %920 = vmatprep.subr.bf16.mxu0 0
    %921 = vmatpush1.bf16.msra.mxu0 0
    %922 = vmatprep.subr.bf16.mxu0 0
    %923 = vmatpush1.bf16.msra.mxu0 0
    %924 = vmatprep.subr.bf16.mxu0 0
    %925 = vmatpush1.bf16.msra.mxu0 0
    %926 = vmatprep.mubr.bf16.mxu0 0
    %927 = vmatmul.mubr.bf16.gmra.mrb[0].mxu0 %v852
    %v928 = vpop.f32.mrb[0].mxu0
    %v929 = vadd.f32 0.0, %v928
    %v930 = vpop.f32.mrb[0].mxu0
    %v931 = vadd.f32 0.0, %v930
    %v932 = vpop.f32.mrb[0].mxu0
    %v933 = vpop.f32.mrb[0].mxu0
    %934 = vdwg.mxu0
    %v935 = vadd.f32 %v848, %v888
    %v936 = vadd.f32 %v849, %v890
    %v937 = vadd.f32 %v850, %v929
    %v938 = vadd.f32 %v851, %v931
    %v939 = vsub.f32 0.0, %v935
    %v940 = vmul.f32 %v939, 1.442695
    %v941 = vpow.pop %v940
    %v942 = vadd.f32 %v941, 1.0
    %v943 = vrcp.pop %v942
    %v944 = vmul.f32 1.0, %v943
    %v945 = vsub.f32 0.0, %v936
    %v946 = vmul.f32 %v945, 1.442695
    %v947 = vpow.pop %v946
    %v948 = vadd.f32 %v947, 1.0
    %v949 = vrcp.pop %v948
    %v950 = vmul.f32 1.0, %v949
    %v951 = vtanh.pop %v937
    %v952 = vsub.f32 0.0, %v938
    %v953 = vmul.f32 %v952, 1.442695
    %v954 = vpow.pop %v953
    %v955 = vadd.f32 %v954, 1.0
    %v956 = vrcp.pop %v955
    %v957 = vmul.f32 1.0, %v956
    %v958 = vmul.f32 %v950, %v843
    %v959 = vmul.f32 %v944, %v951
    %v960 = vadd.f32 %v958, %v959
    %v961 = vtanh.pop %v960
    %v962 = vmul.f32 %v957, %v961
    %s963 = scalar_lea.vmem [#allocation3], 8
    %964 = vst [vmem:[%s963] sm:$0xff] %v962
    %s965 = scalar_lea.vmem [#allocation2], 64
    %v966 = vld [vmem:[%s965] sm:$0xff]
    %v967 = vld [vmem:[%s965 + $0x8] sm:$0xff]
    %v968 = vld [vmem:[%s965 + $0x10] sm:$0xff]
    %v969 = vld [vmem:[%s965 + $0x18] sm:$0xff]
    %v970 = vpack.c.bf16 %v962, %v962
    %971 = vmatprep.subr.bf16.mxu0 %v673
    %972 = vmatpush1.bf16.msra.mxu0 %v672
    %973 = vmatprep.subr.bf16.mxu0 %v677
    %974 = vmatpush1.bf16.msra.mxu0 %v676
    %975 = vmatprep.subr.bf16.mxu0 %v681
    %976 = vmatpush1.bf16.msra.mxu0 %v680
    %977 = vmatprep.subr.bf16.mxu0 %v685
    %978 = vmatpush1.bf16.msra.mxu0 %v684
    %979 = vmatprep.subr.bf16.mxu0 %v689
    %980 = vmatpush1.bf16.msra.mxu0 %v688
    %981 = vmatprep.subr.bf16.mxu0 %v693
    %982 = vmatpush1.bf16.msra.mxu0 %v692
    %983 = vmatprep.subr.bf16.mxu0 %v697
    %984 = vmatpush1.bf16.msra.mxu0 %v696
    %985 = vmatprep.subr.bf16.mxu0 %v701
    %986 = vmatpush1.bf16.msra.mxu0 %v700
    %987 = vmatprep.subr.bf16.mxu0 0
    %988 = vmatpush1.bf16.msra.mxu0 0
    %989 = vmatprep.subr.bf16.mxu0 0
    %990 = vmatpush1.bf16.msra.mxu0 0
    %991 = vmatprep.subr.bf16.mxu0 0
    %992 = vmatpush1.bf16.msra.mxu0 0
    %993 = vmatprep.subr.bf16.mxu0 0
    %994 = vmatpush1.bf16.msra.mxu0 0
    %995 = vmatprep.subr.bf16.mxu0 0
    %996 = vmatpush1.bf16.msra.mxu0 0
    %997 = vmatprep.subr.bf16.mxu0 0
    %998 = vmatpush1.bf16.msra.mxu0 0
    %999 = vmatprep.subr.bf16.mxu0 0
    %1000 = vmatpush1.bf16.msra.mxu0 0
    %1001 = vmatprep.subr.bf16.mxu0 0
    %1002 = vmatpush1.bf16.msra.mxu0 0
    %1003 = vmatprep.mubr.bf16.mxu0 0
    %1004 = vmatmul.mubr.bf16.gmra.mrb[0].mxu0 %v970
    %v1005 = vpop.f32.mrb[0].mxu0
    %v1006 = vadd.f32 0.0, %v1005
    %v1007 = vpop.f32.mrb[0].mxu0
    %v1008 = vadd.f32 0.0, %v1007
    %v1009 = vpop.f32.mrb[0].mxu0
    %v1010 = vpop.f32.mrb[0].mxu0
    %1011 = vdwg.mxu0
    %1012 = vmatprep.subr.bf16.mxu0 %v675
    %1013 = vmatpush1.bf16.msra.mxu0 %v674
    %1014 = vmatprep.subr.bf16.mxu0 %v679
    %1015 = vmatpush1.bf16.msra.mxu0 %v678
    %1016 = vmatprep.subr.bf16.mxu0 %v683
    %1017 = vmatpush1.bf16.msra.mxu0 %v682
    %1018 = vmatprep.subr.bf16.mxu0 %v687
    %1019 = vmatpush1.bf16.msra.mxu0 %v686
    %1020 = vmatprep.subr.bf16.mxu0 %v691
    %1021 = vmatpush1.bf16.msra.mxu0 %v690
    %1022 = vmatprep.subr.bf16.mxu0 %v695
    %1023 = vmatpush1.bf16.msra.mxu0 %v694
    %1024 = vmatprep.subr.bf16.mxu0 %v699
    %1025 = vmatpush1.bf16.msra.mxu0 %v698
    %1026 = vmatprep.subr.bf16.mxu0 %v703
    %1027 = vmatpush1.bf16.msra.mxu0 %v702
    %1028 = vmatprep.subr.bf16.mxu0 0
    %1029 = vmatpush1.bf16.msra.mxu0 0
    %1030 = vmatprep.subr.bf16.mxu0 0
    %1031 = vmatpush1.bf16.msra.mxu0 0
    %1032 = vmatprep.subr.bf16.mxu0 0
    %1033 = vmatpush1.bf16.msra.mxu0 0
    %1034 = vmatprep.subr.bf16.mxu0 0
    %1035 = vmatpush1.bf16.msra.mxu0 0
    %1036 = vmatprep.subr.bf16.mxu0 0
    %1037 = vmatpush1.bf16.msra.mxu0 0
    %1038 = vmatprep.subr.bf16.mxu0 0
    %1039 = vmatpush1.bf16.msra.mxu0 0
    %1040 = vmatprep.subr.bf16.mxu0 0
    %1041 = vmatpush1.bf16.msra.mxu0 0
    %1042 = vmatprep.subr.bf16.mxu0 0
    %1043 = vmatpush1.bf16.msra.mxu0 0
    %1044 = vmatprep.mubr.bf16.mxu0 0
    %1045 = vmatmul.mubr.bf16.gmra.mrb[0].mxu0 %v970
    %v1046 = vpop.f32.mrb[0].mxu0
    %v1047 = vadd.f32 0.0, %v1046
    %v1048 = vpop.f32.mrb[0].mxu0
    %v1049 = vadd.f32 0.0, %v1048
    %v1050 = vpop.f32.mrb[0].mxu0
    %v1051 = vpop.f32.mrb[0].mxu0
    %1052 = vdwg.mxu0
    %v1053 = vadd.f32 %v966, %v1006
    %v1054 = vadd.f32 %v967, %v1008
    %v1055 = vadd.f32 %v968, %v1047
    %v1056 = vadd.f32 %v969, %v1049
    %v1057 = vsub.f32 0.0, %v1053
    %v1058 = vmul.f32 %v1057, 1.442695
    %v1059 = vpow.pop %v1058
    %v1060 = vadd.f32 %v1059, 1.0
    %v1061 = vrcp.pop %v1060
    %v1062 = vmul.f32 1.0, %v1061
    %v1063 = vsub.f32 0.0, %v1054
    %v1064 = vmul.f32 %v1063, 1.442695
    %v1065 = vpow.pop %v1064
    %v1066 = vadd.f32 %v1065, 1.0
    %v1067 = vrcp.pop %v1066
    %v1068 = vmul.f32 1.0, %v1067
    %v1069 = vtanh.pop %v1055
    %v1070 = vsub.f32 0.0, %v1056
    %v1071 = vmul.f32 %v1070, 1.442695
    %v1072 = vpow.pop %v1071
    %v1073 = vadd.f32 %v1072, 1.0
    %v1074 = vrcp.pop %v1073
    %v1075 = vmul.f32 1.0, %v1074
    %v1076 = vmul.f32 %v1068, %v960
    %v1077 = vmul.f32 %v1062, %v1069
    %v1078 = vadd.f32 %v1076, %v1077
    %v1079 = vtanh.pop %v1078
    %v1080 = vmul.f32 %v1075, %v1079
    %s1081 = scalar_lea.vmem [#allocation3], 16
    %1082 = vst [vmem:[%s1081] sm:$0xff] %v1080
    %s1083 = scalar_lea.vmem [#allocation2], 96
    %v1084 = vld [vmem:[%s1083] sm:$0xff]
    %v1085 = vld [vmem:[%s1083 + $0x8] sm:$0xff]
    %v1086 = vld [vmem:[%s1083 + $0x10] sm:$0xff]
    %v1087 = vld [vmem:[%s1083 + $0x18] sm:$0xff]
    %v1088 = vpack.c.bf16 %v1080, %v1080
    %1089 = vmatprep.subr.bf16.mxu0 %v673
    %1090 = vmatpush1.bf16.msra.mxu0 %v672
    %1091 = vmatprep.subr.bf16.mxu0 %v677
    %1092 = vmatpush1.bf16.msra.mxu0 %v676
    %1093 = vmatprep.subr.bf16.mxu0 %v681
    %1094 = vmatpush1.bf16.msra.mxu0 %v680
    %1095 = vmatprep.subr.bf16.mxu0 %v685
    %1096 = vmatpush1.bf16.msra.mxu0 %v684
    %1097 = vmatprep.subr.bf16.mxu0 %v689
    %1098 = vmatpush1.bf16.msra.mxu0 %v688
    %1099 = vmatprep.subr.bf16.mxu0 %v693
    %1100 = vmatpush1.bf16.msra.mxu0 %v692
    %1101 = vmatprep.subr.bf16.mxu0 %v697
    %1102 = vmatpush1.bf16.msra.mxu0 %v696
    %1103 = vmatprep.subr.bf16.mxu0 %v701
    %1104 = vmatpush1.bf16.msra.mxu0 %v700
    %1105 = vmatprep.subr.bf16.mxu0 0
    %1106 = vmatpush1.bf16.msra.mxu0 0
    %1107 = vmatprep.subr.bf16.mxu0 0
    %1108 = vmatpush1.bf16.msra.mxu0 0
    %1109 = vmatprep.subr.bf16.mxu0 0
    %1110 = vmatpush1.bf16.msra.mxu0 0
    %1111 = vmatprep.subr.bf16.mxu0 0
    %1112 = vmatpush1.bf16.msra.mxu0 0
    %1113 = vmatprep.subr.bf16.mxu0 0
    %1114 = vmatpush1.bf16.msra.mxu0 0
    %1115 = vmatprep.subr.bf16.mxu0 0
    %1116 = vmatpush1.bf16.msra.mxu0 0
    %1117 = vmatprep.subr.bf16.mxu0 0
    %1118 = vmatpush1.bf16.msra.mxu0 0
    %1119 = vmatprep.subr.bf16.mxu0 0
    %1120 = vmatpush1.bf16.msra.mxu0 0
    %1121 = vmatprep.mubr.bf16.mxu0 0
    %1122 = vmatmul.mubr.bf16.gmra.mrb[0].mxu0 %v1088
    %v1123 = vpop.f32.mrb[0].mxu0
    %v1124 = vadd.f32 0.0, %v1123
    %v1125 = vpop.f32.mrb[0].mxu0
    %v1126 = vadd.f32 0.0, %v1125
    %v1127 = vpop.f32.mrb[0].mxu0
    %v1128 = vpop.f32.mrb[0].mxu0
    %1129 = vdwg.mxu0
    %1130 = vmatprep.subr.bf16.mxu0 %v675
    %1131 = vmatpush1.bf16.msra.mxu0 %v674
    %1132 = vmatprep.subr.bf16.mxu0 %v679
    %1133 = vmatpush1.bf16.msra.mxu0 %v678
    %1134 = vmatprep.subr.bf16.mxu0 %v683
    %1135 = vmatpush1.bf16.msra.mxu0 %v682
    %1136 = vmatprep.subr.bf16.mxu0 %v687
    %1137 = vmatpush1.bf16.msra.mxu0 %v686
    %1138 = vmatprep.subr.bf16.mxu0 %v691
    %1139 = vmatpush1.bf16.msra.mxu0 %v690
    %1140 = vmatprep.subr.bf16.mxu0 %v695
    %1141 = vmatpush1.bf16.msra.mxu0 %v694
    %1142 = vmatprep.subr.bf16.mxu0 %v699
    %1143 = vmatpush1.bf16.msra.mxu0 %v698
    %1144 = vmatprep.subr.bf16.mxu0 %v703
    %1145 = vmatpush1.bf16.msra.mxu0 %v702
    %1146 = vmatprep.subr.bf16.mxu0 0
    %1147 = vmatpush1.bf16.msra.mxu0 0
    %1148 = vmatprep.subr.bf16.mxu0 0
    %1149 = vmatpush1.bf16.msra.mxu0 0
    %1150 = vmatprep.subr.bf16.mxu0 0
    %1151 = vmatpush1.bf16.msra.mxu0 0
    %1152 = vmatprep.subr.bf16.mxu0 0
    %1153 = vmatpush1.bf16.msra.mxu0 0
    %1154 = vmatprep.subr.bf16.mxu0 0
    %1155 = vmatpush1.bf16.msra.mxu0 0
    %1156 = vmatprep.subr.bf16.mxu0 0
    %1157 = vmatpush1.bf16.msra.mxu0 0
    %1158 = vmatprep.subr.bf16.mxu0 0
    %1159 = vmatpush1.bf16.msra.mxu0 0
    %1160 = vmatprep.subr.bf16.mxu0 0
    %1161 = vmatpush1.bf16.msra.mxu0 0
    %1162 = vmatprep.mubr.bf16.mxu0 0
    %1163 = vmatmul.mubr.bf16.gmra.mrb[0].mxu0 %v1088
    %v1164 = vpop.f32.mrb[0].mxu0
    %v1165 = vadd.f32 0.0, %v1164
    %v1166 = vpop.f32.mrb[0].mxu0
    %v1167 = vadd.f32 0.0, %v1166
    %v1168 = vpop.f32.mrb[0].mxu0
    %v1169 = vpop.f32.mrb[0].mxu0
    %1170 = vdwg.mxu0
    %v1171 = vadd.f32 %v1084, %v1124
    %v1172 = vadd.f32 %v1085, %v1126
    %v1173 = vadd.f32 %v1086, %v1165
    %v1174 = vadd.f32 %v1087, %v1167
    %v1175 = vsub.f32 0.0, %v1171
    %v1176 = vmul.f32 %v1175, 1.442695
    %v1177 = vpow.pop %v1176
    %v1178 = vadd.f32 %v1177, 1.0
    %v1179 = vrcp.pop %v1178
    %v1180 = vmul.f32 1.0, %v1179
    %v1181 = vsub.f32 0.0, %v1172
    %v1182 = vmul.f32 %v1181, 1.442695
    %v1183 = vpow.pop %v1182
    %v1184 = vadd.f32 %v1183, 1.0
    %v1185 = vrcp.pop %v1184
    %v1186 = vmul.f32 1.0, %v1185
    %v1187 = vtanh.pop %v1173
    %v1188 = vsub.f32 0.0, %v1174
    %v1189 = vmul.f32 %v1188, 1.442695
    %v1190 = vpow.pop %v1189
    %v1191 = vadd.f32 %v1190, 1.0
    %v1192 = vrcp.pop %v1191
    %v1193 = vmul.f32 1.0, %v1192
    %v1194 = vmul.f32 %v1186, %v1078
    %v1195 = vmul.f32 %v1180, %v1187
    %v1196 = vadd.f32 %v1194, %v1195
    %v1197 = vtanh.pop %v1196
    %v1198 = vmul.f32 %v1193, %v1197
    %s1199 = scalar_lea.vmem [#allocation3], 24
    %1200 = vst [vmem:[%s1199] sm:$0xff] %v1198
    %s1201 = scalar_lea.vmem [#allocation2], 128
    %v1202 = vld [vmem:[%s1201] sm:$0xff]
    %v1203 = vld [vmem:[%s1201 + $0x8] sm:$0xff]
    %v1204 = vld [vmem:[%s1201 + $0x10] sm:$0xff]
    %v1205 = vld [vmem:[%s1201 + $0x18] sm:$0xff]
    %v1206 = vpack.c.bf16 %v1198, %v1198
    %1207 = vmatprep.subr.bf16.mxu0 %v673
    %1208 = vmatpush1.bf16.msra.mxu0 %v672
    %1209 = vmatprep.subr.bf16.mxu0 %v677
    %1210 = vmatpush1.bf16.msra.mxu0 %v676
    %1211 = vmatprep.subr.bf16.mxu0 %v681
    %1212 = vmatpush1.bf16.msra.mxu0 %v680
    %1213 = vmatprep.subr.bf16.mxu0 %v685
    %1214 = vmatpush1.bf16.msra.mxu0 %v684
    %1215 = vmatprep.subr.bf16.mxu0 %v689
    %1216 = vmatpush1.bf16.msra.mxu0 %v688
    %1217 = vmatprep.subr.bf16.mxu0 %v693
    %1218 = vmatpush1.bf16.msra.mxu0 %v692
    %1219 = vmatprep.subr.bf16.mxu0 %v697
    %1220 = vmatpush1.bf16.msra.mxu0 %v696
    %1221 = vmatprep.subr.bf16.mxu0 %v701
    %1222 = vmatpush1.bf16.msra.mxu0 %v700
    %1223 = vmatprep.subr.bf16.mxu0 0
    %1224 = vmatpush1.bf16.msra.mxu0 0
    %1225 = vmatprep.subr.bf16.mxu0 0
    %1226 = vmatpush1.bf16.msra.mxu0 0
    %1227 = vmatprep.subr.bf16.mxu0 0
    %1228 = vmatpush1.bf16.msra.mxu0 0
    %1229 = vmatprep.subr.bf16.mxu0 0
    %1230 = vmatpush1.bf16.msra.mxu0 0
    %1231 = vmatprep.subr.bf16.mxu0 0
    %1232 = vmatpush1.bf16.msra.mxu0 0
    %1233 = vmatprep.subr.bf16.mxu0 0
    %1234 = vmatpush1.bf16.msra.mxu0 0
    %1235 = vmatprep.subr.bf16.mxu0 0
    %1236 = vmatpush1.bf16.msra.mxu0 0
    %1237 = vmatprep.subr.bf16.mxu0 0
    %1238 = vmatpush1.bf16.msra.mxu0 0
    %1239 = vmatprep.mubr.bf16.mxu0 0
    %1240 = vmatmul.mubr.bf16.gmra.mrb[0].mxu0 %v1206
    %v1241 = vpop.f32.mrb[0].mxu0
    %v1242 = vadd.f32 0.0, %v1241
    %v1243 = vpop.f32.mrb[0].mxu0
    %v1244 = vadd.f32 0.0, %v1243
    %v1245 = vpop.f32.mrb[0].mxu0
    %v1246 = vpop.f32.mrb[0].mxu0
    %1247 = vdwg.mxu0
    %1248 = vmatprep.subr.bf16.mxu0 %v675
    %1249 = vmatpush1.bf16.msra.mxu0 %v674
    %1250 = vmatprep.subr.bf16.mxu0 %v679
    %1251 = vmatpush1.bf16.msra.mxu0 %v678
    %1252 = vmatprep.subr.bf16.mxu0 %v683
    %1253 = vmatpush1.bf16.msra.mxu0 %v682
    %1254 = vmatprep.subr.bf16.mxu0 %v687
    %1255 = vmatpush1.bf16.msra.mxu0 %v686
    %1256 = vmatprep.subr.bf16.mxu0 %v691
    %1257 = vmatpush1.bf16.msra.mxu0 %v690
    %1258 = vmatprep.subr.bf16.mxu0 %v695
    %1259 = vmatpush1.bf16.msra.mxu0 %v694
    %1260 = vmatprep.subr.bf16.mxu0 %v699
    %1261 = vmatpush1.bf16.msra.mxu0 %v698
    %1262 = vmatprep.subr.bf16.mxu0 %v703
    %1263 = vmatpush1.bf16.msra.mxu0 %v702
    %1264 = vmatprep.subr.bf16.mxu0 0
    %1265 = vmatpush1.bf16.msra.mxu0 0
    %1266 = vmatprep.subr.bf16.mxu0 0
    %1267 = vmatpush1.bf16.msra.mxu0 0
    %1268 = vmatprep.subr.bf16.mxu0 0
    %1269 = vmatpush1.bf16.msra.mxu0 0
    %1270 = vmatprep.subr.bf16.mxu0 0
    %1271 = vmatpush1.bf16.msra.mxu0 0
    %1272 = vmatprep.subr.bf16.mxu0 0
    %1273 = vmatpush1.bf16.msra.mxu0 0
    %1274 = vmatprep.subr.bf16.mxu0 0
    %1275 = vmatpush1.bf16.msra.mxu0 0
    %1276 = vmatprep.subr.bf16.mxu0 0
    %1277 = vmatpush1.bf16.msra.mxu0 0
    %1278 = vmatprep.subr.bf16.mxu0 0
    %1279 = vmatpush1.bf16.msra.mxu0 0
    %1280 = vmatprep.mubr.bf16.mxu0 0
    %1281 = vmatmul.mubr.bf16.gmra.mrb[0].mxu0 %v1206
    %v1282 = vpop.f32.mrb[0].mxu0
    %v1283 = vadd.f32 0.0, %v1282
    %v1284 = vpop.f32.mrb[0].mxu0
    %v1285 = vadd.f32 0.0, %v1284
    %v1286 = vpop.f32.mrb[0].mxu0
    %v1287 = vpop.f32.mrb[0].mxu0
    %1288 = vdwg.mxu0
    %v1289 = vadd.f32 %v1202, %v1242
    %v1290 = vadd.f32 %v1203, %v1244
    %v1291 = vadd.f32 %v1204, %v1283
    %v1292 = vadd.f32 %v1205, %v1285
    %v1293 = vsub.f32 0.0, %v1289
    %v1294 = vmul.f32 %v1293, 1.442695
    %v1295 = vpow.pop %v1294
    %v1296 = vadd.f32 %v1295, 1.0
    %v1297 = vrcp.pop %v1296
    %v1298 = vmul.f32 1.0, %v1297
    %v1299 = vsub.f32 0.0, %v1290
    %v1300 = vmul.f32 %v1299, 1.442695
    %v1301 = vpow.pop %v1300
    %v1302 = vadd.f32 %v1301, 1.0
    %v1303 = vrcp.pop %v1302
    %v1304 = vmul.f32 1.0, %v1303
    %v1305 = vtanh.pop %v1291
    %v1306 = vsub.f32 0.0, %v1292
    %v1307 = vmul.f32 %v1306, 1.442695
    %v1308 = vpow.pop %v1307
    %v1309 = vadd.f32 %v1308, 1.0
    %v1310 = vrcp.pop %v1309
    %v1311 = vmul.f32 1.0, %v1310
    %v1312 = vmul.f32 %v1304, %v1196
    %v1313 = vmul.f32 %v1298, %v1305
    %v1314 = vadd.f32 %v1312, %v1313
    %v1315 = vtanh.pop %v1314
    %v1316 = vmul.f32 %v1311, %v1315
    %s1317 = scalar_lea.vmem [#allocation3], 32
    %1318 = vst [vmem:[%s1317] sm:$0xff] %v1316
    %s1319 = scalar_lea.vmem [#allocation2], 160
    %v1320 = vld [vmem:[%s1319] sm:$0xff]
    %v1321 = vld [vmem:[%s1319 + $0x8] sm:$0xff]
    %v1322 = vld [vmem:[%s1319 + $0x10] sm:$0xff]
    %v1323 = vld [vmem:[%s1319 + $0x18] sm:$0xff]
    %v1324 = vpack.c.bf16 %v1316, %v1316
    %1325 = vmatprep.subr.bf16.mxu0 %v673
    %1326 = vmatpush1.bf16.msra.mxu0 %v672
    %1327 = vmatprep.subr.bf16.mxu0 %v677
    %1328 = vmatpush1.bf16.msra.mxu0 %v676
    %1329 = vmatprep.subr.bf16.mxu0 %v681
    %1330 = vmatpush1.bf16.msra.mxu0 %v680
    %1331 = vmatprep.subr.bf16.mxu0 %v685
    %1332 = vmatpush1.bf16.msra.mxu0 %v684
    %1333 = vmatprep.subr.bf16.mxu0 %v689
    %1334 = vmatpush1.bf16.msra.mxu0 %v688
    %1335 = vmatprep.subr.bf16.mxu0 %v693
    %1336 = vmatpush1.bf16.msra.mxu0 %v692
    %1337 = vmatprep.subr.bf16.mxu0 %v697
    %1338 = vmatpush1.bf16.msra.mxu0 %v696
    %1339 = vmatprep.subr.bf16.mxu0 %v701
    %1340 = vmatpush1.bf16.msra.mxu0 %v700
    %1341 = vmatprep.subr.bf16.mxu0 0
    %1342 = vmatpush1.bf16.msra.mxu0 0
    %1343 = vmatprep.subr.bf16.mxu0 0
    %1344 = vmatpush1.bf16.msra.mxu0 0
    %1345 = vmatprep.subr.bf16.mxu0 0
    %1346 = vmatpush1.bf16.msra.mxu0 0
    %1347 = vmatprep.subr.bf16.mxu0 0
    %1348 = vmatpush1.bf16.msra.mxu0 0
    %1349 = vmatprep.subr.bf16.mxu0 0
    %1350 = vmatpush1.bf16.msra.mxu0 0
    %1351 = vmatprep.subr.bf16.mxu0 0
    %1352 = vmatpush1.bf16.msra.mxu0 0
    %1353 = vmatprep.subr.bf16.mxu0 0
    %1354 = vmatpush1.bf16.msra.mxu0 0
    %1355 = vmatprep.subr.bf16.mxu0 0
    %1356 = vmatpush1.bf16.msra.mxu0 0
    %1357 = vmatprep.mubr.bf16.mxu0 0
    %1358 = vmatmul.mubr.bf16.gmra.mrb[0].mxu0 %v1324
    %v1359 = vpop.f32.mrb[0].mxu0
    %v1360 = vadd.f32 0.0, %v1359
    %v1361 = vpop.f32.mrb[0].mxu0
    %v1362 = vadd.f32 0.0, %v1361
    %v1363 = vpop.f32.mrb[0].mxu0
    %v1364 = vpop.f32.mrb[0].mxu0
    %1365 = vdwg.mxu0
    %1366 = vmatprep.subr.bf16.mxu0 %v675
    %1367 = vmatpush1.bf16.msra.mxu0 %v674
    %1368 = vmatprep.subr.bf16.mxu0 %v679
    %1369 = vmatpush1.bf16.msra.mxu0 %v678
    %1370 = vmatprep.subr.bf16.mxu0 %v683
    %1371 = vmatpush1.bf16.msra.mxu0 %v682
    %1372 = vmatprep.subr.bf16.mxu0 %v687
    %1373 = vmatpush1.bf16.msra.mxu0 %v686
    %1374 = vmatprep.subr.bf16.mxu0 %v691
    %1375 = vmatpush1.bf16.msra.mxu0 %v690
    %1376 = vmatprep.subr.bf16.mxu0 %v695
    %1377 = vmatpush1.bf16.msra.mxu0 %v694
    %1378 = vmatprep.subr.bf16.mxu0 %v699
    %1379 = vmatpush1.bf16.msra.mxu0 %v698
    %1380 = vmatprep.subr.bf16.mxu0 %v703
    %1381 = vmatpush1.bf16.msra.mxu0 %v702
    %1382 = vmatprep.subr.bf16.mxu0 0
    %1383 = vmatpush1.bf16.msra.mxu0 0
    %1384 = vmatprep.subr.bf16.mxu0 0
    %1385 = vmatpush1.bf16.msra.mxu0 0
    %1386 = vmatprep.subr.bf16.mxu0 0
    %1387 = vmatpush1.bf16.msra.mxu0 0
    %1388 = vmatprep.subr.bf16.mxu0 0
    %1389 = vmatpush1.bf16.msra.mxu0 0
    %1390 = vmatprep.subr.bf16.mxu0 0
    %1391 = vmatpush1.bf16.msra.mxu0 0
    %1392 = vmatprep.subr.bf16.mxu0 0
    %1393 = vmatpush1.bf16.msra.mxu0 0
    %1394 = vmatprep.subr.bf16.mxu0 0
    %1395 = vmatpush1.bf16.msra.mxu0 0
    %1396 = vmatprep.subr.bf16.mxu0 0
    %1397 = vmatpush1.bf16.msra.mxu0 0
    %1398 = vmatprep.mubr.bf16.mxu0 0
    %1399 = vmatmul.mubr.bf16.gmra.mrb[0].mxu0 %v1324
    %v1400 = vpop.f32.mrb[0].mxu0
    %v1401 = vadd.f32 0.0, %v1400
    %v1402 = vpop.f32.mrb[0].mxu0
    %v1403 = vadd.f32 0.0, %v1402
    %v1404 = vpop.f32.mrb[0].mxu0
    %v1405 = vpop.f32.mrb[0].mxu0
    %1406 = vdwg.mxu0
    %v1407 = vadd.f32 %v1320, %v1360
    %v1408 = vadd.f32 %v1321, %v1362
    %v1409 = vadd.f32 %v1322, %v1401
    %v1410 = vadd.f32 %v1323, %v1403
    %v1411 = vsub.f32 0.0, %v1407
    %v1412 = vmul.f32 %v1411, 1.442695
    %v1413 = vpow.pop %v1412
    %v1414 = vadd.f32 %v1413, 1.0
    %v1415 = vrcp.pop %v1414
    %v1416 = vmul.f32 1.0, %v1415
    %v1417 = vsub.f32 0.0, %v1408
    %v1418 = vmul.f32 %v1417, 1.442695
    %v1419 = vpow.pop %v1418
    %v1420 = vadd.f32 %v1419, 1.0
    %v1421 = vrcp.pop %v1420
    %v1422 = vmul.f32 1.0, %v1421
    %v1423 = vtanh.pop %v1409
    %v1424 = vsub.f32 0.0, %v1410
    %v1425 = vmul.f32 %v1424, 1.442695
    %v1426 = vpow.pop %v1425
    %v1427 = vadd.f32 %v1426, 1.0
    %v1428 = vrcp.pop %v1427
    %v1429 = vmul.f32 1.0, %v1428
    %v1430 = vmul.f32 %v1422, %v1314
    %v1431 = vmul.f32 %v1416, %v1423
    %v1432 = vadd.f32 %v1430, %v1431
    %v1433 = vtanh.pop %v1432
    %v1434 = vmul.f32 %v1429, %v1433
    %s1435 = scalar_lea.vmem [#allocation3], 40
    %1436 = vst [vmem:[%s1435] sm:$0xff] %v1434
    %s1437 = scalar_lea.vmem [#allocation2], 192
    %v1438 = vld [vmem:[%s1437] sm:$0xff]
    %v1439 = vld [vmem:[%s1437 + $0x8] sm:$0xff]
    %v1440 = vld [vmem:[%s1437 + $0x10] sm:$0xff]
    %v1441 = vld [vmem:[%s1437 + $0x18] sm:$0xff]
    %v1442 = vpack.c.bf16 %v1434, %v1434
    %1443 = vmatprep.subr.bf16.mxu0 %v673
    %1444 = vmatpush1.bf16.msra.mxu0 %v672
    %1445 = vmatprep.subr.bf16.mxu0 %v677
    %1446 = vmatpush1.bf16.msra.mxu0 %v676
    %1447 = vmatprep.subr.bf16.mxu0 %v681
    %1448 = vmatpush1.bf16.msra.mxu0 %v680
    %1449 = vmatprep.subr.bf16.mxu0 %v685
    %1450 = vmatpush1.bf16.msra.mxu0 %v684
    %1451 = vmatprep.subr.bf16.mxu0 %v689
    %1452 = vmatpush1.bf16.msra.mxu0 %v688
    %1453 = vmatprep.subr.bf16.mxu0 %v693
    %1454 = vmatpush1.bf16.msra.mxu0 %v692
    %1455 = vmatprep.subr.bf16.mxu0 %v697
    %1456 = vmatpush1.bf16.msra.mxu0 %v696
    %1457 = vmatprep.subr.bf16.mxu0 %v701
    %1458 = vmatpush1.bf16.msra.mxu0 %v700
    %1459 = vmatprep.subr.bf16.mxu0 0
    %1460 = vmatpush1.bf16.msra.mxu0 0
    %1461 = vmatprep.subr.bf16.mxu0 0
    %1462 = vmatpush1.bf16.msra.mxu0 0
    %1463 = vmatprep.subr.bf16.mxu0 0
    %1464 = vmatpush1.bf16.msra.mxu0 0
    %1465 = vmatprep.subr.bf16.mxu0 0
    %1466 = vmatpush1.bf16.msra.mxu0 0
    %1467 = vmatprep.subr.bf16.mxu0 0
    %1468 = vmatpush1.bf16.msra.mxu0 0
    %1469 = vmatprep.subr.bf16.mxu0 0
    %1470 = vmatpush1.bf16.msra.mxu0 0
    %1471 = vmatprep.subr.bf16.mxu0 0
    %1472 = vmatpush1.bf16.msra.mxu0 0
    %1473 = vmatprep.subr.bf16.mxu0 0
    %1474 = vmatpush1.bf16.msra.mxu0 0
    %1475 = vmatprep.mubr.bf16.mxu0 0
    %1476 = vmatmul.mubr.bf16.gmra.mrb[0].mxu0 %v1442
    %v1477 = vpop.f32.mrb[0].mxu0
    %v1478 = vadd.f32 0.0, %v1477
    %v1479 = vpop.f32.mrb[0].mxu0
    %v1480 = vadd.f32 0.0, %v1479
    %v1481 = vpop.f32.mrb[0].mxu0
    %v1482 = vpop.f32.mrb[0].mxu0
    %1483 = vdwg.mxu0
    %1484 = vmatprep.subr.bf16.mxu0 %v675
    %1485 = vmatpush1.bf16.msra.mxu0 %v674
    %1486 = vmatprep.subr.bf16.mxu0 %v679
    %1487 = vmatpush1.bf16.msra.mxu0 %v678
    %1488 = vmatprep.subr.bf16.mxu0 %v683
    %1489 = vmatpush1.bf16.msra.mxu0 %v682
    %1490 = vmatprep.subr.bf16.mxu0 %v687
    %1491 = vmatpush1.bf16.msra.mxu0 %v686
    %1492 = vmatprep.subr.bf16.mxu0 %v691
    %1493 = vmatpush1.bf16.msra.mxu0 %v690
    %1494 = vmatprep.subr.bf16.mxu0 %v695
    %1495 = vmatpush1.bf16.msra.mxu0 %v694
    %1496 = vmatprep.subr.bf16.mxu0 %v699
    %1497 = vmatpush1.bf16.msra.mxu0 %v698
    %1498 = vmatprep.subr.bf16.mxu0 %v703
    %1499 = vmatpush1.bf16.msra.mxu0 %v702
    %1500 = vmatprep.subr.bf16.mxu0 0
    %1501 = vmatpush1.bf16.msra.mxu0 0
    %1502 = vmatprep.subr.bf16.mxu0 0
    %1503 = vmatpush1.bf16.msra.mxu0 0
    %1504 = vmatprep.subr.bf16.mxu0 0
    %1505 = vmatpush1.bf16.msra.mxu0 0
    %1506 = vmatprep.subr.bf16.mxu0 0
    %1507 = vmatpush1.bf16.msra.mxu0 0
    %1508 = vmatprep.subr.bf16.mxu0 0
    %1509 = vmatpush1.bf16.msra.mxu0 0
    %1510 = vmatprep.subr.bf16.mxu0 0
    %1511 = vmatpush1.bf16.msra.mxu0 0
    %1512 = vmatprep.subr.bf16.mxu0 0
    %1513 = vmatpush1.bf16.msra.mxu0 0
    %1514 = vmatprep.subr.bf16.mxu0 0
    %1515 = vmatpush1.bf16.msra.mxu0 0
    %1516 = vmatprep.mubr.bf16.mxu0 0
    %1517 = vmatmul.mubr.bf16.gmra.mrb[0].mxu0 %v1442
    %v1518 = vpop.f32.mrb[0].mxu0
    %v1519 = vadd.f32 0.0, %v1518
    %v1520 = vpop.f32.mrb[0].mxu0
    %v1521 = vadd.f32 0.0, %v1520
    %v1522 = vpop.f32.mrb[0].mxu0
    %v1523 = vpop.f32.mrb[0].mxu0
    %1524 = vdwg.mxu0
    %v1525 = vadd.f32 %v1438, %v1478
    %v1526 = vadd.f32 %v1439, %v1480
    %v1527 = vadd.f32 %v1440, %v1519
    %v1528 = vadd.f32 %v1441, %v1521
    %v1529 = vsub.f32 0.0, %v1525
    %v1530 = vmul.f32 %v1529, 1.442695
    %v1531 = vpow.pop %v1530
    %v1532 = vadd.f32 %v1531, 1.0
    %v1533 = vrcp.pop %v1532
    %v1534 = vmul.f32 1.0, %v1533
    %v1535 = vsub.f32 0.0, %v1526
    %v1536 = vmul.f32 %v1535, 1.442695
    %v1537 = vpow.pop %v1536
    %v1538 = vadd.f32 %v1537, 1.0
    %v1539 = vrcp.pop %v1538
    %v1540 = vmul.f32 1.0, %v1539
    %v1541 = vtanh.pop %v1527
    %v1542 = vsub.f32 0.0, %v1528
    %v1543 = vmul.f32 %v1542, 1.442695
    %v1544 = vpow.pop %v1543
    %v1545 = vadd.f32 %v1544, 1.0
    %v1546 = vrcp.pop %v1545
    %v1547 = vmul.f32 1.0, %v1546
    %v1548 = vmul.f32 %v1540, %v1432
    %v1549 = vmul.f32 %v1534, %v1541
    %v1550 = vadd.f32 %v1548, %v1549
    %v1551 = vtanh.pop %v1550
    %v1552 = vmul.f32 %v1547, %v1551
    %s1553 = scalar_lea.vmem [#allocation3], 48
    %1554 = vst [vmem:[%s1553] sm:$0xff] %v1552
    %s1555 = scalar_lea.vmem [#allocation2], 224
    %v1556 = vld [vmem:[%s1555] sm:$0xff]
    %v1557 = vld [vmem:[%s1555 + $0x8] sm:$0xff]
    %v1558 = vld [vmem:[%s1555 + $0x10] sm:$0xff]
    %v1559 = vld [vmem:[%s1555 + $0x18] sm:$0xff]
    %v1560 = vpack.c.bf16 %v1552, %v1552
    %1561 = vmatprep.subr.bf16.mxu0 %v673
    %1562 = vmatpush1.bf16.msra.mxu0 %v672
    %1563 = vmatprep.subr.bf16.mxu0 %v677
    %1564 = vmatpush1.bf16.msra.mxu0 %v676
    %1565 = vmatprep.subr.bf16.mxu0 %v681
    %1566 = vmatpush1.bf16.msra.mxu0 %v680
    %1567 = vmatprep.subr.bf16.mxu0 %v685
    %1568 = vmatpush1.bf16.msra.mxu0 %v684
    %1569 = vmatprep.subr.bf16.mxu0 %v689
    %1570 = vmatpush1.bf16.msra.mxu0 %v688
    %1571 = vmatprep.subr.bf16.mxu0 %v693
    %1572 = vmatpush1.bf16.msra.mxu0 %v692
    %1573 = vmatprep.subr.bf16.mxu0 %v697
    %1574 = vmatpush1.bf16.msra.mxu0 %v696
    %1575 = vmatprep.subr.bf16.mxu0 %v701
    %1576 = vmatpush1.bf16.msra.mxu0 %v700
    %1577 = vmatprep.subr.bf16.mxu0 0
    %1578 = vmatpush1.bf16.msra.mxu0 0
    %1579 = vmatprep.subr.bf16.mxu0 0
    %1580 = vmatpush1.bf16.msra.mxu0 0
    %1581 = vmatprep.subr.bf16.mxu0 0
    %1582 = vmatpush1.bf16.msra.mxu0 0
    %1583 = vmatprep.subr.bf16.mxu0 0
    %1584 = vmatpush1.bf16.msra.mxu0 0
    %1585 = vmatprep.subr.bf16.mxu0 0
    %1586 = vmatpush1.bf16.msra.mxu0 0
    %1587 = vmatprep.subr.bf16.mxu0 0
    %1588 = vmatpush1.bf16.msra.mxu0 0
    %1589 = vmatprep.subr.bf16.mxu0 0
    %1590 = vmatpush1.bf16.msra.mxu0 0
    %1591 = vmatprep.subr.bf16.mxu0 0
    %1592 = vmatpush1.bf16.msra.mxu0 0
    %1593 = vmatprep.mubr.bf16.mxu0 0
    %1594 = vmatmul.mubr.bf16.gmra.mrb[0].mxu0 %v1560
    %v1595 = vpop.f32.mrb[0].mxu0
    %v1596 = vadd.f32 0.0, %v1595
    %v1597 = vpop.f32.mrb[0].mxu0
    %v1598 = vadd.f32 0.0, %v1597
    %v1599 = vpop.f32.mrb[0].mxu0
    %v1600 = vpop.f32.mrb[0].mxu0
    %1601 = vdwg.mxu0
    %1602 = vmatprep.subr.bf16.mxu0 %v675
    %1603 = vmatpush1.bf16.msra.mxu0 %v674
    %1604 = vmatprep.subr.bf16.mxu0 %v679
    %1605 = vmatpush1.bf16.msra.mxu0 %v678
    %1606 = vmatprep.subr.bf16.mxu0 %v683
    %1607 = vmatpush1.bf16.msra.mxu0 %v682
    %1608 = vmatprep.subr.bf16.mxu0 %v687
    %1609 = vmatpush1.bf16.msra.mxu0 %v686
    %1610 = vmatprep.subr.bf16.mxu0 %v691
    %1611 = vmatpush1.bf16.msra.mxu0 %v690
    %1612 = vmatprep.subr.bf16.mxu0 %v695
    %1613 = vmatpush1.bf16.msra.mxu0 %v694
    %1614 = vmatprep.subr.bf16.mxu0 %v699
    %1615 = vmatpush1.bf16.msra.mxu0 %v698
    %1616 = vmatprep.subr.bf16.mxu0 %v703
    %1617 = vmatpush1.bf16.msra.mxu0 %v702
    %1618 = vmatprep.subr.bf16.mxu0 0
    %1619 = vmatpush1.bf16.msra.mxu0 0
    %1620 = vmatprep.subr.bf16.mxu0 0
    %1621 = vmatpush1.bf16.msra.mxu0 0
    %1622 = vmatprep.subr.bf16.mxu0 0
    %1623 = vmatpush1.bf16.msra.mxu0 0
    %1624 = vmatprep.subr.bf16.mxu0 0
    %1625 = vmatpush1.bf16.msra.mxu0 0
    %1626 = vmatprep.subr.bf16.mxu0 0
    %1627 = vmatpush1.bf16.msra.mxu0 0
    %1628 = vmatprep.subr.bf16.mxu0 0
    %1629 = vmatpush1.bf16.msra.mxu0 0
    %1630 = vmatprep.subr.bf16.mxu0 0
    %1631 = vmatpush1.bf16.msra.mxu0 0
    %1632 = vmatprep.subr.bf16.mxu0 0
    %1633 = vmatpush1.bf16.msra.mxu0 0
    %1634 = vmatprep.mubr.bf16.mxu0 0
    %1635 = vmatmul.mubr.bf16.gmra.mrb[0].mxu0 %v1560
    %v1636 = vpop.f32.mrb[0].mxu0
    %v1637 = vadd.f32 0.0, %v1636
    %v1638 = vpop.f32.mrb[0].mxu0
    %v1639 = vadd.f32 0.0, %v1638
    %v1640 = vpop.f32.mrb[0].mxu0
    %v1641 = vpop.f32.mrb[0].mxu0
    %1642 = vdwg.mxu0
    %v1643 = vadd.f32 %v1556, %v1596
    %v1644 = vadd.f32 %v1557, %v1598
    %v1645 = vadd.f32 %v1558, %v1637
    %v1646 = vadd.f32 %v1559, %v1639
    %v1647 = vsub.f32 0.0, %v1643
    %v1648 = vmul.f32 %v1647, 1.442695
    %v1649 = vpow.pop %v1648
    %v1650 = vadd.f32 %v1649, 1.0
    %v1651 = vrcp.pop %v1650
    %v1652 = vmul.f32 1.0, %v1651
    %v1653 = vsub.f32 0.0, %v1644
    %v1654 = vmul.f32 %v1653, 1.442695
    %v1655 = vpow.pop %v1654
    %v1656 = vadd.f32 %v1655, 1.0
    %v1657 = vrcp.pop %v1656
    %v1658 = vmul.f32 1.0, %v1657
    %v1659 = vtanh.pop %v1645
    %v1660 = vsub.f32 0.0, %v1646
    %v1661 = vmul.f32 %v1660, 1.442695
    %v1662 = vpow.pop %v1661
    %v1663 = vadd.f32 %v1662, 1.0
    %v1664 = vrcp.pop %v1663
    %v1665 = vmul.f32 1.0, %v1664
    %v1666 = vmul.f32 %v1658, %v1550
    %v1667 = vmul.f32 %v1652, %v1659
    %v1668 = vadd.f32 %v1666, %v1667
    %v1669 = vtanh.pop %v1668
    %v1670 = vmul.f32 %v1665, %v1669
    %s1671 = scalar_lea.vmem [#allocation3], 56
    %1672 = vst [vmem:[%s1671] sm:$0xff] %v1670
    %1673 = vst [vmem:[#allocation16] sm:$0xff] %v1670
    %1674 = vst [vmem:[#allocation18] sm:$0xff] %v1668
    %v1675 = vld [vmem:[#allocation3] sm:$0xff]
    %v1676 = vld [vmem:[#allocation3 + $0x8] sm:$0xff]
    %v1677 = vld [vmem:[#allocation3 + $0x10] sm:$0xff]
    %v1678 = vld [vmem:[#allocation3 + $0x18] sm:$0xff]
    %v1679 = vld [vmem:[#allocation3 + $0x20] sm:$0xff]
    %v1680 = vld [vmem:[#allocation3 + $0x28] sm:$0xff]
    %v1681 = vld [vmem:[#allocation3 + $0x30] sm:$0xff]
    %v1682 = vld [vmem:[#allocation3 + $0x38] sm:$0xff]
    %v1683 = vpack.c.bf16 %v1676, %v1675
    %v1684 = vpack.c.bf16 %v1678, %v1677
    %v1685 = vpack.c.bf16 %v1680, %v1679
    %v1686 = vpack.c.bf16 %v1682, %v1681
    %v1687 = vld [vmem:[#allocation13] sm:$0xf]
    %v1688 = vld [vmem:[#allocation13 + $0x4] sm:$0xf]
    %v1689 = vld [vmem:[#allocation13 + $0x8] sm:$0xf]
    %v1690 = vld [vmem:[#allocation13 + $0xc] sm:$0xf]
    %v1691 = vld [vmem:[#allocation13 + $0x10] sm:$0xf]
    %v1692 = vld [vmem:[#allocation13 + $0x14] sm:$0xf]
    %v1693 = vld [vmem:[#allocation13 + $0x18] sm:$0xf]
    %v1694 = vld [vmem:[#allocation13 + $0x1c] sm:$0xf]
    %v1695 = vld [vmem:[#allocation13 + $0x20] sm:$0xf]
    %v1696 = vld [vmem:[#allocation13 + $0x24] sm:$0xf]
    %v1697 = vld [vmem:[#allocation13 + $0x28] sm:$0xf]
    %v1698 = vld [vmem:[#allocation13 + $0x2c] sm:$0xf]
    %v1699 = vld [vmem:[#allocation13 + $0x30] sm:$0xf]
    %v1700 = vld [vmem:[#allocation13 + $0x34] sm:$0xf]
    %v1701 = vld [vmem:[#allocation13 + $0x38] sm:$0xf]
    %v1702 = vld [vmem:[#allocation13 + $0x3c] sm:$0xf]
    %v1703 = vld [vmem:[%s7] sm:$0x1]
    %v1705 = vlaneseq
    %v1706 = vshrl.u32 %v1705, 7
    %v1707 = vsub.s32 0, %v1706
    %v1708 = vrot.slane %v1703, %v1707
    %v1726 = vunpack.c.l.b16 %v1687
    %v1727 = vunpack.c.l.b16 %v1688
    %v1728 = vunpack.c.l.b16 %v1689
    %v1729 = vunpack.c.l.b16 %v1690
    %v1730 = vunpack.c.l.b16 %v1691
    %v1731 = vunpack.c.l.b16 %v1692
    %v1732 = vunpack.c.l.b16 %v1693
    %v1733 = vunpack.c.l.b16 %v1694
    %v1734 = vunpack.c.l.b16 %v1695
    %v1735 = vunpack.c.l.b16 %v1696
    %v1736 = vunpack.c.l.b16 %v1697
    %v1737 = vunpack.c.l.b16 %v1698
    %v1738 = vunpack.c.l.b16 %v1699
    %v1739 = vunpack.c.l.b16 %v1700
    %v1740 = vunpack.c.l.b16 %v1701
    %v1741 = vunpack.c.l.b16 %v1702
    %v1742 = vpack.c.b16 %v1727, %v1726
    %v1743 = vpack.c.b16 %v1729, %v1728
    %v1744 = vpack.c.b16 %v1731, %v1730
    %v1745 = vpack.c.b16 %v1733, %v1732
    %v1746 = vpack.c.b16 %v1735, %v1734
    %v1747 = vpack.c.b16 %v1737, %v1736
    %v1748 = vpack.c.b16 %v1739, %v1738
    %v1749 = vpack.c.b16 %v1741, %v1740
    %1758 = vmatprep.subr.bf16.mxu0 0
    %1759 = vmatpush1.bf16.msra.mxu0 %v1742
    %1760 = vmatprep.subr.bf16.mxu0 0
    %1761 = vmatpush1.bf16.msra.mxu0 %v1743
    %1762 = vmatprep.subr.bf16.mxu0 0
    %1763 = vmatpush1.bf16.msra.mxu0 %v1744
    %1764 = vmatprep.subr.bf16.mxu0 0
    %1765 = vmatpush1.bf16.msra.mxu0 %v1745
    %1766 = vmatprep.subr.bf16.mxu0 0
    %1767 = vmatpush1.bf16.msra.mxu0 %v1746
    %1768 = vmatprep.subr.bf16.mxu0 0
    %1769 = vmatpush1.bf16.msra.mxu0 %v1747
    %1770 = vmatprep.subr.bf16.mxu0 0
    %1771 = vmatpush1.bf16.msra.mxu0 %v1748
    %1772 = vmatprep.subr.bf16.mxu0 0
    %1773 = vmatpush1.bf16.msra.mxu0 %v1749
    %1774 = vmatprep.subr.bf16.mxu0 0
    %1775 = vmatpush1.bf16.msra.mxu0 0
    %1776 = vmatprep.subr.bf16.mxu0 0
    %1777 = vmatpush1.bf16.msra.mxu0 0
    %1778 = vmatprep.subr.bf16.mxu0 0
    %1779 = vmatpush1.bf16.msra.mxu0 0
    %1780 = vmatprep.subr.bf16.mxu0 0
    %1781 = vmatpush1.bf16.msra.mxu0 0
    %1782 = vmatprep.subr.bf16.mxu0 0
    %1783 = vmatpush1.bf16.msra.mxu0 0
    %1784 = vmatprep.subr.bf16.mxu0 0
    %1785 = vmatpush1.bf16.msra.mxu0 0
    %1786 = vmatprep.subr.bf16.mxu0 0
    %1787 = vmatpush1.bf16.msra.mxu0 0
    %1788 = vmatprep.subr.bf16.mxu0 0
    %1789 = vmatpush1.bf16.msra.mxu0 0
    %1790 = vmatprep.mubr.bf16.mxu0 0
    %1791 = vmatmul.mubr.bf16.gmra.mrb[0].mxu0 %v1683
    %v1792 = vpop.f32.mrb[0].mxu0
    %v1793 = vadd.f32 %v1708, %v1792
    %v1794 = vpop.f32.mrb[0].mxu0
    %v1795 = vpop.f32.mrb[0].mxu0
    %v1796 = vadd.f32 %v1708, %v1795
    %v1797 = vpop.f32.mrb[0].mxu0
    %1798 = vmatprep.mubr.bf16.mxu0 0
    %1799 = vmatmul.mubr.bf16.gmra.mrb[0].mxu0 %v1684
    %v1800 = vpop.f32.mrb[0].mxu0
    %v1801 = vadd.f32 %v1708, %v1800
    %v1802 = vpop.f32.mrb[0].mxu0
    %v1803 = vpop.f32.mrb[0].mxu0
    %v1804 = vadd.f32 %v1708, %v1803
    %v1805 = vpop.f32.mrb[0].mxu0
    %1806 = vmatprep.mubr.bf16.mxu0 0
    %1807 = vmatmul.mubr.bf16.gmra.mrb[0].mxu0 %v1685
    %v1808 = vpop.f32.mrb[0].mxu0
    %v1809 = vadd.f32 %v1708, %v1808
    %v1810 = vpop.f32.mrb[0].mxu0
    %v1811 = vpop.f32.mrb[0].mxu0
    %v1812 = vadd.f32 %v1708, %v1811
    %v1813 = vpop.f32.mrb[0].mxu0
    %1814 = vmatprep.mubr.bf16.mxu0 0
    %1815 = vmatmul.mubr.bf16.gmra.mrb[0].mxu0 %v1686
    %v1816 = vpop.f32.mrb[0].mxu0
    %v1817 = vadd.f32 %v1708, %v1816
    %v1818 = vpop.f32.mrb[0].mxu0
    %v1819 = vpop.f32.mrb[0].mxu0
    %v1820 = vadd.f32 %v1708, %v1819
    %v1821 = vpop.f32.mrb[0].mxu0
    %1822 = vdwg.mxu0
    %1823 = vst [vmem:[#allocation15] sm:$0xff] %v1793
    %1824 = vst [vmem:[#allocation15 + $0x8] sm:$0xff] %v1796
    %1825 = vst [vmem:[#allocation15 + $0x10] sm:$0xff] %v1801
    %1826 = vst [vmem:[#allocation15 + $0x18] sm:$0xff] %v1804
    %1827 = vst [vmem:[#allocation15 + $0x20] sm:$0xff] %v1809
    %1828 = vst [vmem:[#allocation15 + $0x28] sm:$0xff] %v1812
    %1829 = vst [vmem:[#allocation15 + $0x30] sm:$0xff] %v1817
    %1830 = vst [vmem:[#allocation15 + $0x38] sm:$0xff] %v1820
    // Predicated region
    $region58: #{tpu_custom_call.1} parent=1 // pred_check
      _
    $region59: #{tpu_custom_call.1} parent=1 // pred_check_branch
      %1832 = sbr.rel (0) target = $region61
    $region60: #{tpu_custom_call.1} parent=1 // pred_region
      %s1834 = ssub.s32 1024, 1024
      %1835 = vsyncadd [#allocation6], %s1834
      %s1836 = sshll.u32 [#allocation15], 4
      %s1837 = int_to_ptr.vmem [resolvable:$true] %s1836
      %1842 = dma.vmem_to_hbm [thread:$0]  %s1837, 1024, %s8, [#allocation6], 128, 128, 8
    $region61: #{tpu_custom_call.1} parent=1 // pred_fallthru
      _
    // Predicated region
    $region62: #{tpu_custom_call.1} parent=1 // pred_check
      _
    $region63: #{tpu_custom_call.1} parent=1 // pred_check_branch
      %1844 = sbr.rel (0) target = $region65
    $region64: #{tpu_custom_call.1} parent=1 // pred_region
      %s1846 = ssub.s32 128, 128
      %1847 = vsyncadd [#allocation17], %s1846
      %s1849 = sshll.u32 [#allocation16], 4
      %s1850 = int_to_ptr.vmem [resolvable:$true] %s1849
      %1852 = dma.vmem_to_hbm [thread:$0]  %s1850, 128, %s9, [#allocation17]
    $region65: #{tpu_custom_call.1} parent=1 // pred_fallthru
      _
    // Predicated region
    $region66: #{tpu_custom_call.1} parent=1 // pred_check
      _
    $region67: #{tpu_custom_call.1} parent=1 // pred_check_branch
      %1854 = sbr.rel (0) target = $region69
    $region68: #{tpu_custom_call.1} parent=1 // pred_region
      %s1856 = ssub.s32 128, 128
      %1857 = vsyncadd [#allocation17], %s1856
      %s1859 = sshll.u32 [#allocation18], 4
      %s1860 = int_to_ptr.vmem [resolvable:$true] %s1859
      %1862 = dma.vmem_to_hbm [thread:$0]  %s1860, 128, %s10, [#allocation17]
    $region69: #{tpu_custom_call.1} parent=1 // pred_fallthru
      _
    // Predicated region
    $region70: #{tpu_custom_call.1} parent=1 // pred_check
      _
    $region71: #{tpu_custom_call.1} parent=1 // pred_check_branch
      %1864 = sbr.rel (0) target = $region73
    $region72: #{tpu_custom_call.1} parent=1 // pred_region
      %1865 = dma.done [#allocation6], 1024
    $region73: #{tpu_custom_call.1} parent=1 // pred_fallthru
      _
    // Predicated region
    $region74: #{tpu_custom_call.1} parent=1 // pred_check
      _
    $region75: #{tpu_custom_call.1} parent=1 // pred_check_branch
      %1867 = sbr.rel (0) target = $region77
    $region76: #{tpu_custom_call.1} parent=1 // pred_region
      %1868 = dma.done [#allocation17], 128
    $region77: #{tpu_custom_call.1} parent=1 // pred_fallthru
      _
    // Predicated region
    $region78: #{tpu_custom_call.1} parent=1 // pred_check
      _
    $region79: #{tpu_custom_call.1} parent=1 // pred_check_branch
      %1870 = sbr.rel (0) target = $region81
    $region80: #{tpu_custom_call.1} parent=1 // pred_region
      %1871 = dma.done [#allocation17], 128
    $region81: #{tpu_custom_call.1} parent=1 // pred_fallthru
      _
    %1872 = vsyncpa [#allocation5], 1
    %1873 = vsyncpa [#allocation8], 1
    %1874 = vsyncpa [#allocation11], 1
    %1875 = vsyncpa [#allocation14], 1
    %1876 = vsyncpa [#allocation6], 1
    %1877 = vsyncpa [#allocation17], 1

</llo_original>
